<compile_context>
chip_gen: v5e
topology: v5e:2x2
jax: 0.10.0
libtpu: 0.0.40
codegen_flags: <defaults>
</compile_context>

<pallas_src>
import functools

import jax
import jax.numpy as jnp
import numpy as np
from jax import lax
from jax.experimental import pallas as pl
from jax.experimental.pallas import tpu as pltpu

_BN_EPS = 1e-5


def _silu_f32(z):
    # z * sigmoid(z); exp on the EUP, divide via the EUP approx reciprocal.
    return z * pl.reciprocal(1.0 + jnp.exp(-z), approx=True)


# ----------------------------- fused Pallas kernel ---------------------------

def _fused_downsample_kernel(xph_ref, halo_ref, w1_ref, b1_ref, w2a_ref,
                             b2a_ref, w2b_ref, b2b_ref, o_ref, *,
                             n_hblocks, Wo):
    """One block of R output image rows (P = R*Wo output pixels).

    xph_ref : (4, P, C)  bf16  x phases: [even/even, even/odd, odd/even, odd/odd]
    halo_ref: (2, Wo, C) bf16  odd-row phases of the output row above the block
    o_ref   : (P, 2*inter)     lane-dense [x1 | x2]
    """
    f32 = jnp.float32

    xee = xph_ref[0]          # x[2j,   2i]
    xeo = xph_ref[1]          # x[2j,   2i+1]
    xoe = xph_ref[2]          # x[2j+1, 2i]
    xoo = xph_ref[3]          # x[2j+1, 2i+1]
    P = xee.shape[0]

    # ---- branch 1: 2x2/s2 maxpool -> 1x1 conv (BN folded) -> SiLU ----------
    m = jnp.maximum(jnp.maximum(xee, xeo), jnp.maximum(xoe, xoo))
    x1 = _silu_f32(jnp.dot(m, w1_ref[...], preferred_element_type=f32)
                   + b1_ref[...])

    # ---- branch 2a: 1x1 conv (BN folded) -> SiLU on every needed x phase ---
    w2a = w2a_ref[...]
    b2a = b2a_ref[...]

    def conv1x1_silu(z):      # bf16 in -> bf16 out, f32 accumulate + epilogue
        acc = jnp.dot(z, w2a, preferred_element_type=f32) + b2a
        return _silu_f32(acc).astype(z.dtype)

    ya = conv1x1_silu(xee)    # y(2j,   2i)
    yb = conv1x1_silu(xeo)    # y(2j,   2i+1)
    yc = conv1x1_silu(xoe)    # y(2j+1, 2i)
    yd = conv1x1_silu(xoo)    # y(2j+1, 2i+1)

    # halo row: y at original row 2*oh0 - 1 (needed by the kh=0 taps of the
    # block's first output row).  The 3x3 conv zero-pads in *y* space, so for
    # the first block of every image the halo must be 0 (not SiLU(b2a)).
    yhc = conv1x1_silu(halo_ref[0])       # y(2*oh0-1, 2i)
    yhd = conv1x1_silu(halo_ref[1])       # y(2*oh0-1, 2i+1)
    not_first = (pl.program_id(0) % n_hblocks) != 0
    yhc = jnp.where(not_first, yhc, jnp.zeros_like(yhc))
    yhd = jnp.where(not_first, yhd, jnp.zeros_like(yhd))

    # previous-output-row variants (kh = 0 taps): shift down by one image row.
    ypc = jnp.concatenate([yhc, yc[:P - Wo]], axis=0)      # y(2j-1, 2i)
    ypd = jnp.concatenate([yhd, yd[:P - Wo]], axis=0)      # y(2j-1, 2i+1)

    # left-neighbour variants (kw = 0 taps): shift by one output col, zero i=0.
    col0 = (lax.broadcasted_iota(jnp.int32, (P, 1), 0) % Wo) == 0

    def shift_col(z):
        zr = jnp.concatenate([jnp.zeros_like(z[:1]), z[:P - 1]], axis=0)
        return jnp.where(col0, jnp.zeros_like(zr), zr)

    ypd_l = shift_col(ypd)    # y(2j-1, 2i-1)
    yb_l = shift_col(yb)      # y(2j,   2i-1)
    yd_l = shift_col(yd)      # y(2j+1, 2i-1)

    # ---- branch 2b: 3x3/s2/p1 conv as 9 accumulated bf16 MXU dots ----------
    taps = (ypd_l, ypc, ypd,      # kh = 0 : kw = 0, 1, 2
            yb_l, ya, yb,         # kh = 1
            yd_l, yc, yd)         # kh = 2
    acc2 = jnp.dot(taps[0], w2b_ref[0], preferred_element_type=f32)
    for k in range(1, 9):
        acc2 = acc2 + jnp.dot(taps[k], w2b_ref[k], preferred_element_type=f32)
    x2 = _silu_f32(acc2 + b2b_ref[...])

    # ---- lane-dense store: [x1 | x2] written once at full width ------------
    o_ref[...] = jnp.concatenate([x1, x2], axis=-1).astype(o_ref.dtype)


# ----------------------------- sizing helpers --------------------------------

def _vmem_capacity_bytes():
    try:
        cap = int(pltpu.get_tpu_info().vmem_capacity_bytes)
        if cap > 0:
            return cap
    except Exception:
        pass
    return 64 << 20          # conservative fallback (v7x per-core VMEM)


def _plan_tiles(B, Ho, Wo, C, inter, act_itemsize=2):
    """Pick rows-per-block R (a divisor of Ho) and the scoped-VMEM limit."""
    cap = _vmem_capacity_bytes()

    # folded weights (double-buffered by the pipeline)
    w_bytes = 2 * ((2 * C * inter + 9 * inter * inter) * act_itemsize
                   + 3 * inter * 4)
    act_budget = max(4 << 20, int(0.45 * cap) - w_bytes)

    # per output-image-row VMEM footprint inside the kernel
    per_row = Wo * (2 * (4 * C + 2 * inter) * act_itemsize   # dbl-buffered in+out
                    + 9 * inter * act_itemsize               # bf16 y phases / taps
                    + 8 * inter * 4                          # f32 accumulators
                    + 2 * C * act_itemsize)                  # maxpool temp

    # R must divide Ho (exact tiling, per-image halo) and keep the block's
    # sublane extent (R*Wo) a multiple of 8.
    divisors = [d for d in range(1, Ho + 1)
                if Ho % d == 0 and (d * Wo) % 8 == 0]
    if not divisors:
        # TODO(synk): general Wo (e.g. Wo=10) needs a pixel-padding fallback.
        raise ValueError(f"no row tile with (R*Wo) % 8 == 0 for Ho={Ho}, Wo={Wo}")

    R = divisors[0]
    for d in divisors:                      # largest divisor within budget
        if d * per_row <= act_budget:
            R = d
    # keep >= 2 grid steps so both v7x TensorCores get work when possible
    while B * (Ho // R) < 2:
        smaller = [d for d in divisors if d < R]
        if not smaller:
            break
        R = smaller[-1]

    need = R * per_row + w_bytes
    vmem_limit = int(max(32 << 20, 1.25 * need))
    vmem_limit = int(min(vmem_limit, cap - (8 << 20)))   # legal on v7x (64 MiB)
    vmem_limit = max(vmem_limit, 4 << 20)
    return R, vmem_limit


# ----------------------------- pallas_call wrapper ---------------------------

def pallas_downsample_fused(xph, halo, w1, b1, w2a, b2a, w2b, b2b, *,
                            rows_per_block, n_hblocks, Wo, out_dtype,
                            vmem_limit_bytes):
    _, N, C = xph.shape
    inter = w1.shape[1]
    T = halo.shape[0]
    P = rows_per_block * Wo
    assert T * P == N

    kernel = functools.partial(_fused_downsample_kernel,
                               n_hblocks=n_hblocks, Wo=Wo)

    return pl.pallas_call(
        kernel,
        out_shape=jax.ShapeDtypeStruct((N, 2 * inter), out_dtype),
        grid_spec=pltpu.PrefetchScalarGridSpec(
            num_scalar_prefetch=0,
            grid=(T,),
            in_specs=[
                pl.BlockSpec((4, P, C), lambda t: (0, t, 0)),          # x phases
                pl.BlockSpec((None, 2, Wo, C), lambda t: (t, 0, 0, 0)),  # halo
                pl.BlockSpec((C, inter), lambda t: (0, 0)),            # w1
                pl.BlockSpec((1, inter), lambda t: (0, 0)),            # b1
                pl.BlockSpec((C, inter), lambda t: (0, 0)),            # w2a
                pl.BlockSpec((1, inter), lambda t: (0, 0)),            # b2a
                pl.BlockSpec((9, inter, inter), lambda t: (0, 0, 0)),  # w2b
                pl.BlockSpec((1, inter), lambda t: (0, 0)),            # b2b
            ],
            out_specs=pl.BlockSpec((P, 2 * inter), lambda t: (t, 0))),
        compiler_params=pltpu.CompilerParams(
            dimension_semantics=("parallel",),
            vmem_limit_bytes=vmem_limit_bytes),
    )(xph, halo, w1, b1, w2a, b2a, w2b, b2b)


# ----------------------------- parameters ------------------------------------

def _fold_bn(W_oihw, gamma, beta, mean, var, eps=_BN_EPS):
    """Fold eval-mode BatchNorm into the (bias-free) conv weight."""
    s = gamma / jnp.sqrt(var + eps)                       # [O]
    return W_oihw * s[:, None, None, None], beta - mean * s


def init_downsample_params(key, in_dim, compute_dtype=jnp.bfloat16):
    inter = in_dim // 2
    k1, k2, k3, k4, k5, k6 = jax.random.split(key, 6)

    def bn(k, c):
        kg, kb = jax.random.split(k)
        gamma = 1.0 + 0.1 * jax.random.normal(kg, (c,), jnp.float32)
        beta = 0.1 * jax.random.normal(kb, (c,), jnp.float32)
        mean = jnp.zeros((c,), jnp.float32)   # fresh nn.BatchNorm2d running stats
        var = jnp.ones((c,), jnp.float32)
        return gamma, beta, mean, var

    raw = {
        "W1": 0.2 * jax.random.normal(k1, (inter, in_dim, 1, 1), jnp.float32),
        "bn1": bn(k4, inter),
        "W2a": 0.2 * jax.random.normal(k2, (inter, in_dim, 1, 1), jnp.float32),
        "bn2a": bn(k5, inter),
        "W2b": 0.2 * jax.random.normal(k3, (inter, inter, 3, 3), jnp.float32),
        "bn2b": bn(k6, inter),
    }

    W1e, b1 = _fold_bn(raw["W1"], *raw["bn1"])
    W2ae, b2a = _fold_bn(raw["W2a"], *raw["bn2a"])
    W2be, b2b = _fold_bn(raw["W2b"], *raw["bn2b"])

    folded = {
        # 1x1 convs as [Cin, Cout] matrices (bf16 for the MXU), biases in f32
        "w1": jnp.transpose(W1e[:, :, 0, 0], (1, 0)).astype(compute_dtype),
        "b1": b1.reshape(1, inter),
        "w2a": jnp.transpose(W2ae[:, :, 0, 0], (1, 0)).astype(compute_dtype),
        "b2a": b2a.reshape(1, inter),
        # 3x3 conv as 9 per-tap [Cin, Cout] slices, tap index = kh*3 + kw
        "w2b": jnp.transpose(W2be, (2, 3, 1, 0)).reshape(9, inter, inter)
                  .astype(compute_dtype),
        "b2b": b2b.reshape(1, inter),
    }
    return raw, folded


# ----------------------------- forward ----------------------------------------

def downsample_forward(x_nchw, params, compute_dtype=jnp.bfloat16):
    B, C, H, W = x_nchw.shape
    if (H % 2) or (W % 2) or (C % 2):
        raise ValueError("DownSample kernel expects even C, H and W")
    inter = C // 2
    Ho, Wo = H // 2, W // 2
    N = B * Ho * Wo

    R, vmem_limit = _plan_tiles(B, Ho, Wo, C, inter)
    n_hblocks = Ho // R

    # One XLA copy folds NCHW->NHWC, the bf16 cast and the 2x2 phase split:
    #   xph[2*rp+cp, b*Ho*Wo + j*Wo + i, c] = x[b, c, 2*j+rp, 2*i+cp]
    xph = x_nchw.reshape(B, C, Ho, 2, Wo, 2)
    xph = jnp.transpose(xph, (3, 5, 0, 2, 4, 1)).reshape(4, N, C)
    xph = xph.astype(compute_dtype)

    # Tiny per-block halo: the odd-row phases of the output row just above each
    # row block (zeros for the first block of every image); ~|x|/R extra bytes.
    xph_img = xph.reshape(4, B, Ho, Wo, C)
    if n_hblocks > 1:
        prev = xph_img[2:, :, R - 1:Ho - 1:R]            # (2, B, n_hblocks-1, Wo, C)
        halo = jnp.concatenate([jnp.zeros_like(prev[:, :, :1]), prev], axis=2)
    else:
        halo = jnp.zeros((2, B, 1, Wo, C), xph.dtype)
    halo = jnp.transpose(halo, (1, 2, 0, 3, 4)).reshape(B * n_hblocks, 2, Wo, C)

    out_flat = pallas_downsample_fused(
        xph, halo, params["w1"], params["b1"], params["w2a"], params["b2a"],
        params["w2b"], params["b2b"],
        rows_per_block=R, n_hblocks=n_hblocks, Wo=Wo,
        out_dtype=compute_dtype, vmem_limit_bytes=vmem_limit)   # (N, C) bf16

    # mandatory NHWC->NCHW layout glue; upcast to f32 here (halves kernel writeback)
    out = out_flat.reshape(B, Ho, Wo, C)
    return jnp.transpose(out, (0, 3, 1, 2)).astype(jnp.float32)  # [B, C, Ho, Wo]


# ----------------------------- pure-JAX reference -----------------------------

def downsample_reference(x_nchw, raw):
    def conv_bn_silu(x, W, bn, stride, pad):
        gamma, beta, mean, var = bn
        z = lax.conv_general_dilated(
            x, W, window_strides=(stride, stride),
            padding=[(pad, pad), (pad, pad)],
            dimension_numbers=("NCHW", "OIHW", "NCHW"),
            precision=lax.Precision.HIGHEST)
        s = gamma / jnp.sqrt(var + _BN_EPS)
        t = beta - mean * s
        z = z * s[None, :, None, None] + t[None, :, None, None]
        return z * jax.nn.sigmoid(z)

    mp = lax.reduce_window(x_nchw, -jnp.inf, lax.max,
                           (1, 1, 2, 2), (1, 1, 2, 2), "VALID")
    x1 = conv_bn_silu(mp, raw["W1"], raw["bn1"], 1, 0)
    y = conv_bn_silu(x_nchw, raw["W2a"], raw["bn2a"], 1, 0)
    x2 = conv_bn_silu(y, raw["W2b"], raw["bn2b"], 2, 1)
    return jnp.concatenate([x1, x2], axis=1)


# ----------------------------- main -------------------------------------------

if __name__ == "__main__":
    B, C, H, W = 2, 8, 16, 16
    key = jax.random.PRNGKey(0)
    kx, kp = jax.random.split(key)
    x = jax.random.normal(kx, (B, C, H, W), jnp.float32)

    raw, folded = init_downsample_params(kp, C)

    fwd = jax.jit(downsample_forward)
    out = jax.block_until_ready(fwd(x, folded))
    assert out.shape == (B, C, H // 2, W // 2), out.shape

    ref = jax.block_until_ready(downsample_reference(x, raw))
    # bf16 MXU path + bf16 activations/output -> loosened tolerance vs f32 ref
    np.testing.assert_allclose(np.asarray(out), np.asarray(ref),
                               atol=5e-2, rtol=5e-2)
    print("KERNEL_OK")
</pallas_src>

<mosaic_0001>
module attributes {stable_mosaic.version = 11 : i64} {
  func.func @_fused_downsample_kernel(%arg0: i32, %arg1: memref<4x64x8xbf16, #tpu.memory_space<vmem>>, %arg2: memref<1x2x8x8xbf16, #tpu.memory_space<vmem>>, %arg3: memref<8x4xbf16, #tpu.memory_space<vmem>>, %arg4: memref<1x4xf32, #tpu.memory_space<vmem>>, %arg5: memref<8x4xbf16, #tpu.memory_space<vmem>>, %arg6: memref<1x4xf32, #tpu.memory_space<vmem>>, %arg7: memref<9x4x4xbf16, #tpu.memory_space<vmem>>, %arg8: memref<1x4xf32, #tpu.memory_space<vmem>>, %arg9: memref<64x8xbf16, #tpu.memory_space<vmem>>) attributes {dimension_semantics = [#tpu.dimension_semantics<parallel>], iteration_bounds = array<i64: 2>, scalar_prefetch = 0 : i64, scratch_operands = 0 : i64, tpu.core_type = #tpu.core_type<tc>, window_params = [{transform_indices = @transform_0, window_bounds = array<i64: 4, 64, 8>}, {transform_indices = @transform_1, window_bounds = array<i64: 1, 2, 8, 8>}, {pipeline_mode = #tpu.pipeline_mode<synchronous>, transform_indices = @transform_2, window_bounds = array<i64: 8, 4>}, {pipeline_mode = #tpu.pipeline_mode<synchronous>, transform_indices = @transform_3, window_bounds = array<i64: 1, 4>}, {pipeline_mode = #tpu.pipeline_mode<synchronous>, transform_indices = @transform_4, window_bounds = array<i64: 8, 4>}, {pipeline_mode = #tpu.pipeline_mode<synchronous>, transform_indices = @transform_5, window_bounds = array<i64: 1, 4>}, {pipeline_mode = #tpu.pipeline_mode<synchronous>, transform_indices = @transform_6, window_bounds = array<i64: 9, 4, 4>}, {pipeline_mode = #tpu.pipeline_mode<synchronous>, transform_indices = @transform_7, window_bounds = array<i64: 1, 4>}, {transform_indices = @transform_8, window_bounds = array<i64: 64, 8>}]} {
    %c0 = arith.constant 0 : index
    %c0_0 = arith.constant 0 : index
    %c0_1 = arith.constant 0 : index
    %0 = vector.load %arg1[%c0, %c0_0, %c0_1] : memref<4x64x8xbf16, #tpu.memory_space<vmem>>, vector<1x64x8xbf16>
    %1 = vector.shape_cast %0 : vector<1x64x8xbf16> to vector<64x8xbf16>
    %c1 = arith.constant 1 : index
    %c0_2 = arith.constant 0 : index
    %c0_3 = arith.constant 0 : index
    %2 = vector.load %arg1[%c1, %c0_2, %c0_3] : memref<4x64x8xbf16, #tpu.memory_space<vmem>>, vector<1x64x8xbf16>
    %3 = vector.shape_cast %2 : vector<1x64x8xbf16> to vector<64x8xbf16>
    %c2 = arith.constant 2 : index
    %c0_4 = arith.constant 0 : index
    %c0_5 = arith.constant 0 : index
    %4 = vector.load %arg1[%c2, %c0_4, %c0_5] : memref<4x64x8xbf16, #tpu.memory_space<vmem>>, vector<1x64x8xbf16>
    %5 = vector.shape_cast %4 : vector<1x64x8xbf16> to vector<64x8xbf16>
    %c3 = arith.constant 3 : index
    %c0_6 = arith.constant 0 : index
    %c0_7 = arith.constant 0 : index
    %6 = vector.load %arg1[%c3, %c0_6, %c0_7] : memref<4x64x8xbf16, #tpu.memory_space<vmem>>, vector<1x64x8xbf16>
    %7 = vector.shape_cast %6 : vector<1x64x8xbf16> to vector<64x8xbf16>
    %8 = arith.maximumf %1, %3 : vector<64x8xbf16>
    %9 = arith.maximumf %5, %7 : vector<64x8xbf16>
    %10 = arith.maximumf %8, %9 : vector<64x8xbf16>
    %c0_8 = arith.constant 0 : index
    %c0_9 = arith.constant 0 : index
    %11 = vector.load %arg3[%c0_8, %c0_9] : memref<8x4xbf16, #tpu.memory_space<vmem>>, vector<8x4xbf16>
    %cst = arith.constant dense<0.000000e+00> : vector<64x4xf32>
    %12 = tpu.matmul %10, %11, %cst {dimension_numbers = #tpu.dot_dimension_numbers<[1], [0], [0], [1], [0, 0, 1, 1], [], []>} : vector<64x8xbf16>, vector<8x4xbf16>, vector<64x4xf32> -> vector<64x4xf32>
    %c0_10 = arith.constant 0 : index
    %c0_11 = arith.constant 0 : index
    %13 = vector.load %arg4[%c0_10, %c0_11] : memref<1x4xf32, #tpu.memory_space<vmem>>, vector<1x4xf32>
    %14 = vector.broadcast %13 : vector<1x4xf32> to vector<64x4xf32>
    %15 = arith.addf %12, %14 : vector<64x4xf32>
    %cst_12 = arith.constant 0.000000e+00 : f32
    %16 = vector.broadcast %cst_12 : f32 to vector<64x4xf32>
    %17 = arith.subf %16, %15 : vector<64x4xf32>
    %18 = math.exp %17 : vector<64x4xf32>
    %cst_13 = arith.constant 1.000000e+00 : f32
    %19 = vector.broadcast %cst_13 : f32 to vector<64x4xf32>
    %20 = arith.addf %19, %18 : vector<64x4xf32>
    %21 = tpu.reciprocal %20 {approx = true} : vector<64x4xf32> -> vector<64x4xf32>
    %22 = arith.mulf %15, %21 : vector<64x4xf32>
    %c0_14 = arith.constant 0 : index
    %c0_15 = arith.constant 0 : index
    %23 = vector.load %arg5[%c0_14, %c0_15] : memref<8x4xbf16, #tpu.memory_space<vmem>>, vector<8x4xbf16>
    %c0_16 = arith.constant 0 : index
    %c0_17 = arith.constant 0 : index
    %24 = vector.load %arg6[%c0_16, %c0_17] : memref<1x4xf32, #tpu.memory_space<vmem>>, vector<1x4xf32>
    %cst_18 = arith.constant dense<0.000000e+00> : vector<64x4xf32>
    %25 = tpu.matmul %1, %23, %cst_18 {dimension_numbers = #tpu.dot_dimension_numbers<[1], [0], [0], [1], [0, 0, 1, 1], [], []>} : vector<64x8xbf16>, vector<8x4xbf16>, vector<64x4xf32> -> vector<64x4xf32>
    %26 = vector.broadcast %24 : vector<1x4xf32> to vector<64x4xf32>
    %27 = arith.addf %25, %26 : vector<64x4xf32>
    %cst_19 = arith.constant 0.000000e+00 : f32
    %28 = vector.broadcast %cst_19 : f32 to vector<64x4xf32>
    %29 = arith.subf %28, %27 : vector<64x4xf32>
    %30 = math.exp %29 : vector<64x4xf32>
    %cst_20 = arith.constant 1.000000e+00 : f32
    %31 = vector.broadcast %cst_20 : f32 to vector<64x4xf32>
    %32 = arith.addf %31, %30 : vector<64x4xf32>
    %33 = tpu.reciprocal %32 {approx = true} : vector<64x4xf32> -> vector<64x4xf32>
    %34 = arith.mulf %27, %33 : vector<64x4xf32>
    %35 = arith.truncf %34 : vector<64x4xf32> to vector<64x4xbf16>
    %cst_21 = arith.constant dense<0.000000e+00> : vector<64x4xf32>
    %36 = tpu.matmul %3, %23, %cst_21 {dimension_numbers = #tpu.dot_dimension_numbers<[1], [0], [0], [1], [0, 0, 1, 1], [], []>} : vector<64x8xbf16>, vector<8x4xbf16>, vector<64x4xf32> -> vector<64x4xf32>
    %37 = vector.broadcast %24 : vector<1x4xf32> to vector<64x4xf32>
    %38 = arith.addf %36, %37 : vector<64x4xf32>
    %cst_22 = arith.constant 0.000000e+00 : f32
    %39 = vector.broadcast %cst_22 : f32 to vector<64x4xf32>
    %40 = arith.subf %39, %38 : vector<64x4xf32>
    %41 = math.exp %40 : vector<64x4xf32>
    %cst_23 = arith.constant 1.000000e+00 : f32
    %42 = vector.broadcast %cst_23 : f32 to vector<64x4xf32>
    %43 = arith.addf %42, %41 : vector<64x4xf32>
    %44 = tpu.reciprocal %43 {approx = true} : vector<64x4xf32> -> vector<64x4xf32>
    %45 = arith.mulf %38, %44 : vector<64x4xf32>
    %46 = arith.truncf %45 : vector<64x4xf32> to vector<64x4xbf16>
    %cst_24 = arith.constant dense<0.000000e+00> : vector<64x4xf32>
    %47 = tpu.matmul %5, %23, %cst_24 {dimension_numbers = #tpu.dot_dimension_numbers<[1], [0], [0], [1], [0, 0, 1, 1], [], []>} : vector<64x8xbf16>, vector<8x4xbf16>, vector<64x4xf32> -> vector<64x4xf32>
    %48 = vector.broadcast %24 : vector<1x4xf32> to vector<64x4xf32>
    %49 = arith.addf %47, %48 : vector<64x4xf32>
    %cst_25 = arith.constant 0.000000e+00 : f32
    %50 = vector.broadcast %cst_25 : f32 to vector<64x4xf32>
    %51 = arith.subf %50, %49 : vector<64x4xf32>
    %52 = math.exp %51 : vector<64x4xf32>
    %cst_26 = arith.constant 1.000000e+00 : f32
    %53 = vector.broadcast %cst_26 : f32 to vector<64x4xf32>
    %54 = arith.addf %53, %52 : vector<64x4xf32>
    %55 = tpu.reciprocal %54 {approx = true} : vector<64x4xf32> -> vector<64x4xf32>
    %56 = arith.mulf %49, %55 : vector<64x4xf32>
    %57 = arith.truncf %56 : vector<64x4xf32> to vector<64x4xbf16>
    %cst_27 = arith.constant dense<0.000000e+00> : vector<64x4xf32>
    %58 = tpu.matmul %7, %23, %cst_27 {dimension_numbers = #tpu.dot_dimension_numbers<[1], [0], [0], [1], [0, 0, 1, 1], [], []>} : vector<64x8xbf16>, vector<8x4xbf16>, vector<64x4xf32> -> vector<64x4xf32>
    %59 = vector.broadcast %24 : vector<1x4xf32> to vector<64x4xf32>
    %60 = arith.addf %58, %59 : vector<64x4xf32>
    %cst_28 = arith.constant 0.000000e+00 : f32
    %61 = vector.broadcast %cst_28 : f32 to vector<64x4xf32>
    %62 = arith.subf %61, %60 : vector<64x4xf32>
    %63 = math.exp %62 : vector<64x4xf32>
    %cst_29 = arith.constant 1.000000e+00 : f32
    %64 = vector.broadcast %cst_29 : f32 to vector<64x4xf32>
    %65 = arith.addf %64, %63 : vector<64x4xf32>
    %66 = tpu.reciprocal %65 {approx = true} : vector<64x4xf32> -> vector<64x4xf32>
    %67 = arith.mulf %60, %66 : vector<64x4xf32>
    %68 = arith.truncf %67 : vector<64x4xf32> to vector<64x4xbf16>
    %c0_30 = arith.constant 0 : index
    %c0_31 = arith.constant 0 : index
    %c0_32 = arith.constant 0 : index
    %c0_33 = arith.constant 0 : index
    %69 = vector.load %arg2[%c0_30, %c0_31, %c0_32, %c0_33] : memref<1x2x8x8xbf16, #tpu.memory_space<vmem>>, vector<1x1x8x8xbf16>
    %70 = vector.shape_cast %69 : vector<1x1x8x8xbf16> to vector<8x8xbf16>
    %cst_34 = arith.constant dense<0.000000e+00> : vector<8x4xf32>
    %71 = tpu.matmul %70, %23, %cst_34 {dimension_numbers = #tpu.dot_dimension_numbers<[1], [0], [0], [1], [0, 0, 1, 1], [], []>} : vector<8x8xbf16>, vector<8x4xbf16>, vector<8x4xf32> -> vector<8x4xf32>
    %72 = vector.broadcast %24 : vector<1x4xf32> to vector<8x4xf32>
    %73 = arith.addf %71, %72 : vector<8x4xf32>
    %cst_35 = arith.constant 0.000000e+00 : f32
    %74 = vector.broadcast %cst_35 : f32 to vector<8x4xf32>
    %75 = arith.subf %74, %73 : vector<8x4xf32>
    %76 = math.exp %75 : vector<8x4xf32>
    %cst_36 = arith.constant 1.000000e+00 : f32
    %77 = vector.broadcast %cst_36 : f32 to vector<8x4xf32>
    %78 = arith.addf %77, %76 : vector<8x4xf32>
    %79 = tpu.reciprocal %78 {approx = true} : vector<8x4xf32> -> vector<8x4xf32>
    %80 = arith.mulf %73, %79 : vector<8x4xf32>
    %81 = arith.truncf %80 : vector<8x4xf32> to vector<8x4xbf16>
    %c0_37 = arith.constant 0 : index
    %c1_38 = arith.constant 1 : index
    %c0_39 = arith.constant 0 : index
    %c0_40 = arith.constant 0 : index
    %82 = vector.load %arg2[%c0_37, %c1_38, %c0_39, %c0_40] : memref<1x2x8x8xbf16, #tpu.memory_space<vmem>>, vector<1x1x8x8xbf16>
    %83 = vector.shape_cast %82 : vector<1x1x8x8xbf16> to vector<8x8xbf16>
    %cst_41 = arith.constant dense<0.000000e+00> : vector<8x4xf32>
    %84 = tpu.matmul %83, %23, %cst_41 {dimension_numbers = #tpu.dot_dimension_numbers<[1], [0], [0], [1], [0, 0, 1, 1], [], []>} : vector<8x8xbf16>, vector<8x4xbf16>, vector<8x4xf32> -> vector<8x4xf32>
    %85 = vector.broadcast %24 : vector<1x4xf32> to vector<8x4xf32>
    %86 = arith.addf %84, %85 : vector<8x4xf32>
    %cst_42 = arith.constant 0.000000e+00 : f32
    %87 = vector.broadcast %cst_42 : f32 to vector<8x4xf32>
    %88 = arith.subf %87, %86 : vector<8x4xf32>
    %89 = math.exp %88 : vector<8x4xf32>
    %cst_43 = arith.constant 1.000000e+00 : f32
    %90 = vector.broadcast %cst_43 : f32 to vector<8x4xf32>
    %91 = arith.addf %90, %89 : vector<8x4xf32>
    %92 = tpu.reciprocal %91 {approx = true} : vector<8x4xf32> -> vector<8x4xf32>
    %93 = arith.mulf %86, %92 : vector<8x4xf32>
    %94 = arith.truncf %93 : vector<8x4xf32> to vector<8x4xbf16>
    %c1_i32 = arith.constant 1 : i32
    %c0_i32 = arith.constant 0 : i32
    %95 = arith.cmpi eq, %c1_i32, %c0_i32 : i32
    %c1_i32_44 = arith.constant 1 : i32
    %96 = arith.select %95, %c1_i32_44, %c1_i32 : i32
    %97 = arith.remsi %arg0, %96 : i32
    %c0_i32_45 = arith.constant 0 : i32
    %98 = arith.cmpi ne, %97, %c0_i32_45 : i32
    %c0_i32_46 = arith.constant 0 : i32
    %99 = arith.cmpi slt, %97, %c0_i32_46 : i32
    %c0_i32_47 = arith.constant 0 : i32
    %100 = arith.cmpi slt, %96, %c0_i32_47 : i32
    %101 = arith.xori %99, %100 : i1
    %102 = arith.andi %101, %98 : i1
    %103 = arith.addi %97, %96 : i32
    %104 = arith.select %102, %103, %97 : i32
    %c0_i32_48 = arith.constant 0 : i32
    %105 = arith.cmpi ne, %104, %c0_i32_48 : i32
    %cst_49 = arith.constant 0.000000e+00 : bf16
    %106 = vector.broadcast %cst_49 : bf16 to vector<8x4xbf16>
    %107 = arith.select %105, %81, %106 : vector<8x4xbf16>
    %cst_50 = arith.constant 0.000000e+00 : bf16
    %108 = vector.broadcast %cst_50 : bf16 to vector<8x4xbf16>
    %109 = arith.select %105, %94, %108 : vector<8x4xbf16>
    %110 = vector.extract_strided_slice %57 {offsets = [0, 0], sizes = [56, 4], strides = [1, 1]} : vector<64x4xbf16> to vector<56x4xbf16>
    %111 = tpu.concatenate %107, %110 in 0 : vector<8x4xbf16>, vector<56x4xbf16> -> vector<64x4xbf16>
    %112 = vector.extract_strided_slice %68 {offsets = [0, 0], sizes = [56, 4], strides = [1, 1]} : vector<64x4xbf16> to vector<56x4xbf16>
    %113 = tpu.concatenate %109, %112 in 0 : vector<8x4xbf16>, vector<56x4xbf16> -> vector<64x4xbf16>
    %114 = tpu.iota {dimensions = array<i32: 0>} : vector<64x1xi32>
    %c8_i32 = arith.constant 8 : i32
    %c0_i32_51 = arith.constant 0 : i32
    %115 = arith.cmpi eq, %c8_i32, %c0_i32_51 : i32
    %c1_i32_52 = arith.constant 1 : i32
    %116 = arith.select %115, %c1_i32_52, %c8_i32 : i32
    %117 = vector.broadcast %116 : i32 to vector<64x1xi32>
    %118 = arith.remsi %114, %117 : vector<64x1xi32>
    %c0_i32_53 = arith.constant 0 : i32
    %119 = vector.broadcast %c0_i32_53 : i32 to vector<64x1xi32>
    %120 = arith.cmpi ne, %118, %119 : vector<64x1xi32>
    %c0_i32_54 = arith.constant 0 : i32
    %121 = vector.broadcast %c0_i32_54 : i32 to vector<64x1xi32>
    %122 = arith.cmpi slt, %118, %121 : vector<64x1xi32>
    %c0_i32_55 = arith.constant 0 : i32
    %123 = arith.cmpi slt, %116, %c0_i32_55 : i32
    %124 = vector.broadcast %123 : i1 to vector<64x1xi1>
    %125 = vector.broadcast %124 : vector<64x1xi1> to vector<64x1xi1>
    %126 = arith.xori %122, %125 : vector<64x1xi1>
    %127 = arith.andi %126, %120 : vector<64x1xi1>
    %128 = vector.broadcast %116 : i32 to vector<64x1xi32>
    %129 = arith.addi %118, %128 : vector<64x1xi32>
    %130 = arith.select %127, %129, %118 : vector<64x1xi1>, vector<64x1xi32>
    %c0_i32_56 = arith.constant 0 : i32
    %131 = vector.broadcast %c0_i32_56 : i32 to vector<64x1xi32>
    %132 = arith.cmpi eq, %130, %131 : vector<64x1xi32>
    %cst_57 = arith.constant 0.000000e+00 : bf16
    %133 = vector.broadcast %cst_57 : bf16 to vector<1x4xbf16>
    %134 = vector.extract_strided_slice %113 {offsets = [0, 0], sizes = [63, 4], strides = [1, 1]} : vector<64x4xbf16> to vector<63x4xbf16>
    %135 = tpu.concatenate %133, %134 in 0 : vector<1x4xbf16>, vector<63x4xbf16> -> vector<64x4xbf16>
    %cst_58 = arith.constant 0.000000e+00 : bf16
    %136 = vector.broadcast %cst_58 : bf16 to vector<64x4xbf16>
    %137 = vector.shape_cast %132 : vector<64x1xi1> to vector<64x1xi1>
    %138 = vector.broadcast %137 : vector<64x1xi1> to vector<64x4xi1>
    %139 = arith.select %138, %136, %135 : vector<64x4xi1>, vector<64x4xbf16>
    %cst_59 = arith.constant 0.000000e+00 : bf16
    %140 = vector.broadcast %cst_59 : bf16 to vector<1x4xbf16>
    %141 = vector.extract_strided_slice %46 {offsets = [0, 0], sizes = [63, 4], strides = [1, 1]} : vector<64x4xbf16> to vector<63x4xbf16>
    %142 = tpu.concatenate %140, %141 in 0 : vector<1x4xbf16>, vector<63x4xbf16> -> vector<64x4xbf16>
    %cst_60 = arith.constant 0.000000e+00 : bf16
    %143 = vector.broadcast %cst_60 : bf16 to vector<64x4xbf16>
    %144 = vector.shape_cast %132 : vector<64x1xi1> to vector<64x1xi1>
    %145 = vector.broadcast %144 : vector<64x1xi1> to vector<64x4xi1>
    %146 = arith.select %145, %143, %142 : vector<64x4xi1>, vector<64x4xbf16>
    %cst_61 = arith.constant 0.000000e+00 : bf16
    %147 = vector.broadcast %cst_61 : bf16 to vector<1x4xbf16>
    %148 = vector.extract_strided_slice %68 {offsets = [0, 0], sizes = [63, 4], strides = [1, 1]} : vector<64x4xbf16> to vector<63x4xbf16>
    %149 = tpu.concatenate %147, %148 in 0 : vector<1x4xbf16>, vector<63x4xbf16> -> vector<64x4xbf16>
    %cst_62 = arith.constant 0.000000e+00 : bf16
    %150 = vector.broadcast %cst_62 : bf16 to vector<64x4xbf16>
    %151 = vector.shape_cast %132 : vector<64x1xi1> to vector<64x1xi1>
    %152 = vector.broadcast %151 : vector<64x1xi1> to vector<64x4xi1>
    %153 = arith.select %152, %150, %149 : vector<64x4xi1>, vector<64x4xbf16>
    %c0_63 = arith.constant 0 : index
    %c0_64 = arith.constant 0 : index
    %c0_65 = arith.constant 0 : index
    %154 = vector.load %arg7[%c0_63, %c0_64, %c0_65] : memref<9x4x4xbf16, #tpu.memory_space<vmem>>, vector<1x4x4xbf16>
    %155 = vector.shape_cast %154 : vector<1x4x4xbf16> to vector<4x4xbf16>
    %cst_66 = arith.constant dense<0.000000e+00> : vector<64x4xf32>
    %156 = tpu.matmul %139, %155, %cst_66 {dimension_numbers = #tpu.dot_dimension_numbers<[1], [0], [0], [1], [0, 0, 1, 1], [], []>} : vector<64x4xbf16>, vector<4x4xbf16>, vector<64x4xf32> -> vector<64x4xf32>
    %c1_67 = arith.constant 1 : index
    %c0_68 = arith.constant 0 : index
    %c0_69 = arith.constant 0 : index
    %157 = vector.load %arg7[%c1_67, %c0_68, %c0_69] : memref<9x4x4xbf16, #tpu.memory_space<vmem>>, vector<1x4x4xbf16>
    %158 = vector.shape_cast %157 : vector<1x4x4xbf16> to vector<4x4xbf16>
    %cst_70 = arith.constant dense<0.000000e+00> : vector<64x4xf32>
    %159 = tpu.matmul %111, %158, %cst_70 {dimension_numbers = #tpu.dot_dimension_numbers<[1], [0], [0], [1], [0, 0, 1, 1], [], []>} : vector<64x4xbf16>, vector<4x4xbf16>, vector<64x4xf32> -> vector<64x4xf32>
    %160 = arith.addf %156, %159 : vector<64x4xf32>
    %c2_71 = arith.constant 2 : index
    %c0_72 = arith.constant 0 : index
    %c0_73 = arith.constant 0 : index
    %161 = vector.load %arg7[%c2_71, %c0_72, %c0_73] : memref<9x4x4xbf16, #tpu.memory_space<vmem>>, vector<1x4x4xbf16>
    %162 = vector.shape_cast %161 : vector<1x4x4xbf16> to vector<4x4xbf16>
    %cst_74 = arith.constant dense<0.000000e+00> : vector<64x4xf32>
    %163 = tpu.matmul %113, %162, %cst_74 {dimension_numbers = #tpu.dot_dimension_numbers<[1], [0], [0], [1], [0, 0, 1, 1], [], []>} : vector<64x4xbf16>, vector<4x4xbf16>, vector<64x4xf32> -> vector<64x4xf32>
    %164 = arith.addf %160, %163 : vector<64x4xf32>
    %c3_75 = arith.constant 3 : index
    %c0_76 = arith.constant 0 : index
    %c0_77 = arith.constant 0 : index
    %165 = vector.load %arg7[%c3_75, %c0_76, %c0_77] : memref<9x4x4xbf16, #tpu.memory_space<vmem>>, vector<1x4x4xbf16>
    %166 = vector.shape_cast %165 : vector<1x4x4xbf16> to vector<4x4xbf16>
    %cst_78 = arith.constant dense<0.000000e+00> : vector<64x4xf32>
    %167 = tpu.matmul %146, %166, %cst_78 {dimension_numbers = #tpu.dot_dimension_numbers<[1], [0], [0], [1], [0, 0, 1, 1], [], []>} : vector<64x4xbf16>, vector<4x4xbf16>, vector<64x4xf32> -> vector<64x4xf32>
    %168 = arith.addf %164, %167 : vector<64x4xf32>
    %c4 = arith.constant 4 : index
    %c0_79 = arith.constant 0 : index
    %c0_80 = arith.constant 0 : index
    %169 = vector.load %arg7[%c4, %c0_79, %c0_80] : memref<9x4x4xbf16, #tpu.memory_space<vmem>>, vector<1x4x4xbf16>
    %170 = vector.shape_cast %169 : vector<1x4x4xbf16> to vector<4x4xbf16>
    %cst_81 = arith.constant dense<0.000000e+00> : vector<64x4xf32>
    %171 = tpu.matmul %35, %170, %cst_81 {dimension_numbers = #tpu.dot_dimension_numbers<[1], [0], [0], [1], [0, 0, 1, 1], [], []>} : vector<64x4xbf16>, vector<4x4xbf16>, vector<64x4xf32> -> vector<64x4xf32>
    %172 = arith.addf %168, %171 : vector<64x4xf32>
    %c5 = arith.constant 5 : index
    %c0_82 = arith.constant 0 : index
    %c0_83 = arith.constant 0 : index
    %173 = vector.load %arg7[%c5, %c0_82, %c0_83] : memref<9x4x4xbf16, #tpu.memory_space<vmem>>, vector<1x4x4xbf16>
    %174 = vector.shape_cast %173 : vector<1x4x4xbf16> to vector<4x4xbf16>
    %cst_84 = arith.constant dense<0.000000e+00> : vector<64x4xf32>
    %175 = tpu.matmul %46, %174, %cst_84 {dimension_numbers = #tpu.dot_dimension_numbers<[1], [0], [0], [1], [0, 0, 1, 1], [], []>} : vector<64x4xbf16>, vector<4x4xbf16>, vector<64x4xf32> -> vector<64x4xf32>
    %176 = arith.addf %172, %175 : vector<64x4xf32>
    %c6 = arith.constant 6 : index
    %c0_85 = arith.constant 0 : index
    %c0_86 = arith.constant 0 : index
    %177 = vector.load %arg7[%c6, %c0_85, %c0_86] : memref<9x4x4xbf16, #tpu.memory_space<vmem>>, vector<1x4x4xbf16>
    %178 = vector.shape_cast %177 : vector<1x4x4xbf16> to vector<4x4xbf16>
    %cst_87 = arith.constant dense<0.000000e+00> : vector<64x4xf32>
    %179 = tpu.matmul %153, %178, %cst_87 {dimension_numbers = #tpu.dot_dimension_numbers<[1], [0], [0], [1], [0, 0, 1, 1], [], []>} : vector<64x4xbf16>, vector<4x4xbf16>, vector<64x4xf32> -> vector<64x4xf32>
    %180 = arith.addf %176, %179 : vector<64x4xf32>
    %c7 = arith.constant 7 : index
    %c0_88 = arith.constant 0 : index
    %c0_89 = arith.constant 0 : index
    %181 = vector.load %arg7[%c7, %c0_88, %c0_89] : memref<9x4x4xbf16, #tpu.memory_space<vmem>>, vector<1x4x4xbf16>
    %182 = vector.shape_cast %181 : vector<1x4x4xbf16> to vector<4x4xbf16>
    %cst_90 = arith.constant dense<0.000000e+00> : vector<64x4xf32>
    %183 = tpu.matmul %57, %182, %cst_90 {dimension_numbers = #tpu.dot_dimension_numbers<[1], [0], [0], [1], [0, 0, 1, 1], [], []>} : vector<64x4xbf16>, vector<4x4xbf16>, vector<64x4xf32> -> vector<64x4xf32>
    %184 = arith.addf %180, %183 : vector<64x4xf32>
    %c8 = arith.constant 8 : index
    %c0_91 = arith.constant 0 : index
    %c0_92 = arith.constant 0 : index
    %185 = vector.load %arg7[%c8, %c0_91, %c0_92] : memref<9x4x4xbf16, #tpu.memory_space<vmem>>, vector<1x4x4xbf16>
    %186 = vector.shape_cast %185 : vector<1x4x4xbf16> to vector<4x4xbf16>
    %cst_93 = arith.constant dense<0.000000e+00> : vector<64x4xf32>
    %187 = tpu.matmul %68, %186, %cst_93 {dimension_numbers = #tpu.dot_dimension_numbers<[1], [0], [0], [1], [0, 0, 1, 1], [], []>} : vector<64x4xbf16>, vector<4x4xbf16>, vector<64x4xf32> -> vector<64x4xf32>
    %188 = arith.addf %184, %187 : vector<64x4xf32>
    %c0_94 = arith.constant 0 : index
    %c0_95 = arith.constant 0 : index
    %189 = vector.load %arg8[%c0_94, %c0_95] : memref<1x4xf32, #tpu.memory_space<vmem>>, vector<1x4xf32>
    %190 = vector.broadcast %189 : vector<1x4xf32> to vector<64x4xf32>
    %191 = arith.addf %188, %190 : vector<64x4xf32>
    %cst_96 = arith.constant 0.000000e+00 : f32
    %192 = vector.broadcast %cst_96 : f32 to vector<64x4xf32>
    %193 = arith.subf %192, %191 : vector<64x4xf32>
    %194 = math.exp %193 : vector<64x4xf32>
    %cst_97 = arith.constant 1.000000e+00 : f32
    %195 = vector.broadcast %cst_97 : f32 to vector<64x4xf32>
    %196 = arith.addf %195, %194 : vector<64x4xf32>
    %197 = tpu.reciprocal %196 {approx = true} : vector<64x4xf32> -> vector<64x4xf32>
    %198 = arith.mulf %191, %197 : vector<64x4xf32>
    %199 = tpu.concatenate %22, %198 in 1 : vector<64x4xf32>, vector<64x4xf32> -> vector<64x8xf32>
    %200 = arith.truncf %199 : vector<64x8xf32> to vector<64x8xbf16>
    %c0_98 = arith.constant 0 : index
    %c0_99 = arith.constant 0 : index
    %201 = vector.load %arg9[%c0_98, %c0_99] : memref<64x8xbf16, #tpu.memory_space<vmem>>, vector<64x8xbf16>
    tpu.vector_store %arg9[%c0_98, %c0_99], %200 {strides = array<i32>} : memref<64x8xbf16, #tpu.memory_space<vmem>>, vector<64x8xbf16>,
    return
  }
  func.func @transform_0(%arg0: i32) -> (i32, i32, i32) {
    %c0_i32 = arith.constant 0 : i32
    %c0_i32_0 = arith.constant 0 : i32
    %c0_i32_1 = arith.constant 0 : i32
    return %c0_i32, %arg0, %c0_i32_0 : i32, i32, i32
  }
  func.func @transform_1(%arg0: i32) -> (i32, i32, i32, i32) {
    %c0_i32 = arith.constant 0 : i32
    %c0_i32_0 = arith.constant 0 : i32
    %c0_i32_1 = arith.constant 0 : i32
    %c0_i32_2 = arith.constant 0 : i32
    return %arg0, %c0_i32, %c0_i32_0, %c0_i32_1 : i32, i32, i32, i32
  }
  func.func @transform_2(%arg0: i32) -> (i32, i32) {
    %c0_i32 = arith.constant 0 : i32
    %c0_i32_0 = arith.constant 0 : i32
    %c0_i32_1 = arith.constant 0 : i32
    return %c0_i32, %c0_i32_0 : i32, i32
  }
  func.func @transform_3(%arg0: i32) -> (i32, i32) {
    %c0_i32 = arith.constant 0 : i32
    %c0_i32_0 = arith.constant 0 : i32
    %c0_i32_1 = arith.constant 0 : i32
    return %c0_i32, %c0_i32_0 : i32, i32
  }
  func.func @transform_4(%arg0: i32) -> (i32, i32) {
    %c0_i32 = arith.constant 0 : i32
    %c0_i32_0 = arith.constant 0 : i32
    %c0_i32_1 = arith.constant 0 : i32
    return %c0_i32, %c0_i32_0 : i32, i32
  }
  func.func @transform_5(%arg0: i32) -> (i32, i32) {
    %c0_i32 = arith.constant 0 : i32
    %c0_i32_0 = arith.constant 0 : i32
    %c0_i32_1 = arith.constant 0 : i32
    return %c0_i32, %c0_i32_0 : i32, i32
  }
  func.func @transform_6(%arg0: i32) -> (i32, i32, i32) {
    %c0_i32 = arith.constant 0 : i32
    %c0_i32_0 = arith.constant 0 : i32
    %c0_i32_1 = arith.constant 0 : i32
    %c0_i32_2 = arith.constant 0 : i32
    return %c0_i32, %c0_i32_0, %c0_i32_1 : i32, i32, i32
  }
  func.func @transform_7(%arg0: i32) -> (i32, i32) {
    %c0_i32 = arith.constant 0 : i32
    %c0_i32_0 = arith.constant 0 : i32
    %c0_i32_1 = arith.constant 0 : i32
    return %c0_i32, %c0_i32_0 : i32, i32
  }
  func.func @transform_8(%arg0: i32) -> (i32, i32) {
    %c0_i32 = arith.constant 0 : i32
    %c0_i32_0 = arith.constant 0 : i32
    return %arg0, %c0_i32 : i32, i32
  }
}

</mosaic_0001>

<llo_original>
// kernel: downsample_forward.1
$region0: #{downsample_forward.1}
  #allocation0 [shape = 'u32[]', space=smem, size = 0x4, offset = 0x4, fixed_abs, tag = 'smem constant byte address 0x4 - core index']
  #allocation1 [shape = 'u32[72,128]{1,0:T(1,128)}', space=vmem, size = 0x9000, scoped, tag = 'internal scratch']
  %s0 = inlined_call_operand.vmem [shape: bf16[4,128,8], index: 0, kind: input, shape index: {}]
  %s1 = inlined_call_operand.vmem [shape: bf16[2,2,8,8], index: 1, kind: input, shape index: {}]
  %s2 = inlined_call_operand.vmem [shape: bf16[8,4], index: 2, kind: input, shape index: {}]
  %s3 = inlined_call_operand.vmem [shape: f32[1,4], index: 3, kind: input, shape index: {}]
  %s4 = inlined_call_operand.vmem [shape: bf16[8,4], index: 4, kind: input, shape index: {}]
  %s5 = inlined_call_operand.vmem [shape: f32[1,4], index: 5, kind: input, shape index: {}]
  %s6 = inlined_call_operand.vmem [shape: bf16[9,4,4], index: 6, kind: input, shape index: {}]
  %s7 = inlined_call_operand.vmem [shape: f32[1,4], index: 7, kind: input, shape index: {}]
  %s8 = inlined_call_operand.vmem [shape: bf16[128,8], index: 8, kind: output, shape index: {}]
  %s9 = sld [smem:[#allocation0]]
  $region106: #{downsample_forward.1} parent=0
    _
  %s11 = ssub.s32 1, %s9
  %s12 = scalar_select 0, %s11, %s9
  $region1: #{downsample_forward.1} parent=0
    #allocation2 [shape = 'u8[131072]{0}', space=vmem, size = 0x20000, scoped, tag = 'input window, operand 0']
    loop: start=0, step=1, limit=4
    $region2: #{downsample_forward.1} parent=1 // loop_pre_header
      _
    $region3: #{downsample_forward.1} parent=1 // loop_header
      %s14 = sphi 0, %s18
      %p15 = scmp.ge.s32.totalorder %s14, 4
      %s24 = sphi 0, %s26
      %s27 = sphi 0, %s24
      %s28 = sphi 0, %s27
      %s44 = sphi 0, %s28
      %s50 = sphi 0, %s52
      %s53 = sphi 0, %s50
      %s54 = sphi 0, %s53
      %s70 = sphi 0, %s54
      %s74 = sphi 0, %s74
      %s76 = sphi 0, %s74
      %s77 = sphi 0, %s76
      %s91 = sphi 0, %s77
      %s95 = sphi 0, %s95
      %s97 = sphi 0, %s95
      %s98 = sphi 0, %s97
      %s112 = sphi 0, %s98
      %s116 = sphi 0, %s116
      %s118 = sphi 0, %s116
      %s119 = sphi 0, %s118
      %s133 = sphi 0, %s119
      %s137 = sphi 0, %s137
      %s139 = sphi 0, %s137
      %s140 = sphi 0, %s139
      %s154 = sphi 0, %s140
      %s158 = sphi 0, %s158
      %s160 = sphi 0, %s158
      %s161 = sphi 0, %s160
      %s175 = sphi 0, %s161
      %s179 = sphi 0, %s179
      %s181 = sphi 0, %s179
      %s182 = sphi 0, %s181
      %s196 = sphi 0, %s182
      %s202 = sphi 0, %s204
      %s205 = sphi 0, %s202
      %s206 = sphi 0, %s205
      %s222 = sphi 0, %s206
    $region4: #{downsample_forward.1} parent=1 // loop_header_branch
      %17 = sbr.rel (%p15) target = $region8
    $region5: #{downsample_forward.1} parent=1 // loop_body
      %s19 = ssub.s32 %s14, 1
      %s20 = ssub.s32 %s14, 2
      %s21 = sadd.s32 %s14, 1
      %s22 = ssub.s32 %s14, %s21
      %p23 = scmp.eq.s32.totalorder %s22, 0
      %s25 = sadd.s32 %s24, 1
      %s26 = scalar_select %p23, %s24, %s25
      %p29 = pneg %p23
      %p30 = scmp.eq.s32.totalorder %s14, 1
      %p31 = por %p29, %p30
      %p32 = scmp.ne.s32.totalorder %s24, %s27
      %p33 = scmp.eq.s32.totalorder %s14, 0
      %p34 = por %p32, %p33
      %p35 = scmp.ne.s32.totalorder %s24, %s27
      %p36 = scmp.eq.s32.totalorder %s19, 1
      %p37 = por %p35, %p36
      %p38 = scmp.ne.s32.totalorder %s27, %s28
      %p39 = scmp.eq.s32.totalorder %s19, 0
      %p40 = por %p38, %p39
      %p41 = scmp.ne.s32.totalorder %s27, %s28
      %p42 = scmp.eq.s32.totalorder %s20, 1
      %p43 = por %p41, %p42
      %p45 = scmp.ne.s32.totalorder %s28, %s44
      %p46 = scmp.eq.s32.totalorder %s20, 0
      %p47 = por %p45, %p46
      %s48 = ssub.s32 %s14, %s21
      %p49 = scmp.eq.s32.totalorder %s48, 0
      %s51 = sadd.s32 %s50, 1
      %s52 = scalar_select %p49, %s50, %s51
      %p55 = pneg %p49
      %p56 = scmp.eq.s32.totalorder %s14, 1
      %p57 = por %p55, %p56
      %p58 = scmp.ne.s32.totalorder %s50, %s53
      %p59 = scmp.eq.s32.totalorder %s14, 0
      %p60 = por %p58, %p59
      %p61 = scmp.ne.s32.totalorder %s50, %s53
      %p62 = scmp.eq.s32.totalorder %s19, 1
      %p63 = por %p61, %p62
      %p64 = scmp.ne.s32.totalorder %s53, %s54
      %p65 = scmp.eq.s32.totalorder %s19, 0
      %p66 = por %p64, %p65
      %p67 = scmp.ne.s32.totalorder %s53, %s54
      %p68 = scmp.eq.s32.totalorder %s20, 1
      %p69 = por %p67, %p68
      %p71 = scmp.ne.s32.totalorder %s54, %s70
      %p72 = scmp.eq.s32.totalorder %s20, 0
      %p73 = por %p71, %p72
      %s75 = sadd.s32 %s74, 1
      %p78 = scmp.eq.s32.totalorder %s14, 1
      %p79 = scmp.ne.s32.totalorder %s74, %s76
      %p80 = scmp.eq.s32.totalorder %s14, 0
      %p81 = por %p79, %p80
      %p82 = scmp.ne.s32.totalorder %s74, %s76
      %p83 = scmp.eq.s32.totalorder %s19, 1
      %p84 = por %p82, %p83
      %p85 = scmp.ne.s32.totalorder %s76, %s77
      %p86 = scmp.eq.s32.totalorder %s19, 0
      %p87 = por %p85, %p86
      %p88 = scmp.ne.s32.totalorder %s76, %s77
      %p89 = scmp.eq.s32.totalorder %s20, 1
      %p90 = por %p88, %p89
      %p92 = scmp.ne.s32.totalorder %s77, %s91
      %p93 = scmp.eq.s32.totalorder %s20, 0
      %p94 = por %p92, %p93
      %s96 = sadd.s32 %s95, 1
      %p99 = scmp.eq.s32.totalorder %s14, 1
      %p100 = scmp.ne.s32.totalorder %s95, %s97
      %p101 = scmp.eq.s32.totalorder %s14, 0
      %p102 = por %p100, %p101
      %p103 = scmp.ne.s32.totalorder %s95, %s97
      %p104 = scmp.eq.s32.totalorder %s19, 1
      %p105 = por %p103, %p104
      %p106 = scmp.ne.s32.totalorder %s97, %s98
      %p107 = scmp.eq.s32.totalorder %s19, 0
      %p108 = por %p106, %p107
      %p109 = scmp.ne.s32.totalorder %s97, %s98
      %p110 = scmp.eq.s32.totalorder %s20, 1
      %p111 = por %p109, %p110
      %p113 = scmp.ne.s32.totalorder %s98, %s112
      %p114 = scmp.eq.s32.totalorder %s20, 0
      %p115 = por %p113, %p114
      %s117 = sadd.s32 %s116, 1
      %p120 = scmp.eq.s32.totalorder %s14, 1
      %p121 = scmp.ne.s32.totalorder %s116, %s118
      %p122 = scmp.eq.s32.totalorder %s14, 0
      %p123 = por %p121, %p122
      %p124 = scmp.ne.s32.totalorder %s116, %s118
      %p125 = scmp.eq.s32.totalorder %s19, 1
      %p126 = por %p124, %p125
      %p127 = scmp.ne.s32.totalorder %s118, %s119
      %p128 = scmp.eq.s32.totalorder %s19, 0
      %p129 = por %p127, %p128
      %p130 = scmp.ne.s32.totalorder %s118, %s119
      %p131 = scmp.eq.s32.totalorder %s20, 1
      %p132 = por %p130, %p131
      %p134 = scmp.ne.s32.totalorder %s119, %s133
      %p135 = scmp.eq.s32.totalorder %s20, 0
      %p136 = por %p134, %p135
      %s138 = sadd.s32 %s137, 1
      %p141 = scmp.eq.s32.totalorder %s14, 1
      %p142 = scmp.ne.s32.totalorder %s137, %s139
      %p143 = scmp.eq.s32.totalorder %s14, 0
      %p144 = por %p142, %p143
      %p145 = scmp.ne.s32.totalorder %s137, %s139
      %p146 = scmp.eq.s32.totalorder %s19, 1
      %p147 = por %p145, %p146
      %p148 = scmp.ne.s32.totalorder %s139, %s140
      %p149 = scmp.eq.s32.totalorder %s19, 0
      %p150 = por %p148, %p149
      %p151 = scmp.ne.s32.totalorder %s139, %s140
      %p152 = scmp.eq.s32.totalorder %s20, 1
      %p153 = por %p151, %p152
      %p155 = scmp.ne.s32.totalorder %s140, %s154
      %p156 = scmp.eq.s32.totalorder %s20, 0
      %p157 = por %p155, %p156
      %s159 = sadd.s32 %s158, 1
      %p162 = scmp.eq.s32.totalorder %s14, 1
      %p163 = scmp.ne.s32.totalorder %s158, %s160
      %p164 = scmp.eq.s32.totalorder %s14, 0
      %p165 = por %p163, %p164
      %p166 = scmp.ne.s32.totalorder %s158, %s160
      %p167 = scmp.eq.s32.totalorder %s19, 1
      %p168 = por %p166, %p167
      %p169 = scmp.ne.s32.totalorder %s160, %s161
      %p170 = scmp.eq.s32.totalorder %s19, 0
      %p171 = por %p169, %p170
      %p172 = scmp.ne.s32.totalorder %s160, %s161
      %p173 = scmp.eq.s32.totalorder %s20, 1
      %p174 = por %p172, %p173
      %p176 = scmp.ne.s32.totalorder %s161, %s175
      %p177 = scmp.eq.s32.totalorder %s20, 0
      %p178 = por %p176, %p177
      %s180 = sadd.s32 %s179, 1
      %p183 = scmp.eq.s32.totalorder %s14, 1
      %p184 = scmp.ne.s32.totalorder %s179, %s181
      %p185 = scmp.eq.s32.totalorder %s14, 0
      %p186 = por %p184, %p185
      %p187 = scmp.ne.s32.totalorder %s179, %s181
      %p188 = scmp.eq.s32.totalorder %s19, 1
      %p189 = por %p187, %p188
      %p190 = scmp.ne.s32.totalorder %s181, %s182
      %p191 = scmp.eq.s32.totalorder %s19, 0
      %p192 = por %p190, %p191
      %p193 = scmp.ne.s32.totalorder %s181, %s182
      %p194 = scmp.eq.s32.totalorder %s20, 1
      %p195 = por %p193, %p194
      %p197 = scmp.ne.s32.totalorder %s182, %s196
      %p198 = scmp.eq.s32.totalorder %s20, 0
      %p199 = por %p197, %p198
      %s200 = ssub.s32 %s14, %s21
      %p201 = scmp.eq.s32.totalorder %s200, 0
      %s203 = sadd.s32 %s202, 1
      %s204 = scalar_select %p201, %s202, %s203
      %p207 = pneg %p201
      %p208 = scmp.eq.s32.totalorder %s14, 1
      %p209 = por %p207, %p208
      %p210 = scmp.ne.s32.totalorder %s202, %s205
      %p211 = scmp.eq.s32.totalorder %s14, 0
      %p212 = por %p210, %p211
      %p213 = scmp.ne.s32.totalorder %s202, %s205
      %p214 = scmp.eq.s32.totalorder %s19, 1
      %p215 = por %p213, %p214
      %p216 = scmp.ne.s32.totalorder %s205, %s206
      %p217 = scmp.eq.s32.totalorder %s19, 0
      %p218 = por %p216, %p217
      %p219 = scmp.ne.s32.totalorder %s205, %s206
      %p220 = scmp.eq.s32.totalorder %s20, 1
      %p221 = por %p219, %p220
      %p223 = scmp.ne.s32.totalorder %s206, %s222
      %p224 = scmp.eq.s32.totalorder %s20, 0
      %p225 = por %p223, %p224
      %p226 = scmp.le.s32.totalorder 1, %s14
      %p227 = scmp.lt.s32.totalorder %s14, 3
      %p228 = pnand %p226, %p227
      %p229 = pneg %p228
      // Predicated region
      $region9: #{downsample_forward.1} parent=5 // pred_check
        _
      $region10: #{downsample_forward.1} parent=5 // pred_check_branch
        %231 = sbr.rel (%p228) target = $region12
      $region11: #{downsample_forward.1} parent=5 // pred_region
        %s232 = ssub.s32 %s14, 1
        // Predicated region
        $region13: #{downsample_forward.1} parent=11 // pred_check
          %p233 = pneg %p87
        $region14: #{downsample_forward.1} parent=11 // pred_check_branch
          %235 = sbr.rel (%p233) target = $region16
        $region15: #{downsample_forward.1} parent=11 // pred_region
          _
        $region16: #{downsample_forward.1} parent=11 // pred_fallthru
          _
        // Predicated region
        $region17: #{downsample_forward.1} parent=11 // pred_check
          %p236 = pneg %p108
        $region18: #{downsample_forward.1} parent=11 // pred_check_branch
          %238 = sbr.rel (%p236) target = $region20
        $region19: #{downsample_forward.1} parent=11 // pred_region
          _
        $region20: #{downsample_forward.1} parent=11 // pred_fallthru
          _
        // Predicated region
        $region21: #{downsample_forward.1} parent=11 // pred_check
          %p239 = pneg %p129
        $region22: #{downsample_forward.1} parent=11 // pred_check_branch
          %241 = sbr.rel (%p239) target = $region24
        $region23: #{downsample_forward.1} parent=11 // pred_region
          _
        $region24: #{downsample_forward.1} parent=11 // pred_fallthru
          _
        // Predicated region
        $region25: #{downsample_forward.1} parent=11 // pred_check
          %p242 = pneg %p150
        $region26: #{downsample_forward.1} parent=11 // pred_check_branch
          %244 = sbr.rel (%p242) target = $region28
        $region27: #{downsample_forward.1} parent=11 // pred_region
          _
        $region28: #{downsample_forward.1} parent=11 // pred_fallthru
          _
        // Predicated region
        $region29: #{downsample_forward.1} parent=11 // pred_check
          %p245 = pneg %p171
        $region30: #{downsample_forward.1} parent=11 // pred_check_branch
          %247 = sbr.rel (%p245) target = $region32
        $region31: #{downsample_forward.1} parent=11 // pred_region
          _
        $region32: #{downsample_forward.1} parent=11 // pred_fallthru
          _
        // Predicated region
        $region33: #{downsample_forward.1} parent=11 // pred_check
          %p248 = pneg %p192
        $region34: #{downsample_forward.1} parent=11 // pred_check_branch
          %250 = sbr.rel (%p248) target = $region36
        $region35: #{downsample_forward.1} parent=11 // pred_region
          _
        $region36: #{downsample_forward.1} parent=11 // pred_fallthru
          _
      $region12: #{downsample_forward.1} parent=5 // pred_fallthru
        _
      %p251 = scmp.lt.s32.totalorder %s14, 2
      // Predicated region
      $region37: #{downsample_forward.1} parent=5 // pred_check
        %p252 = pneg %p251
      $region38: #{downsample_forward.1} parent=5 // pred_check_branch
        %254 = sbr.rel (%p252) target = $region40
      $region39: #{downsample_forward.1} parent=5 // pred_region
        // Predicated region
        $region41: #{downsample_forward.1} parent=39 // pred_check
          %p255 = pneg %p34
        $region42: #{downsample_forward.1} parent=39 // pred_check_branch
          %257 = sbr.rel (%p255) target = $region44
        $region43: #{downsample_forward.1} parent=39 // pred_region
          %s258 = sand.u32 %s24, 1
          %s259 = sand.u32 %s24, 1
          %s260 = smul.addr %s259, 128
          %s261 = scalar_lea.vmem [#allocation2], %s260
          %s262 = smul.u32 8, %s14
          %s263 = smul.addr %s262, 4
          %s264 = scalar_lea.vmem %s0, %s263
          // Predicated region
          $region45: #{downsample_forward.1} parent=43 // pred_check
            _
          $region46: #{downsample_forward.1} parent=43 // pred_check_branch
            %266 = sbr.rel (0) target = $region48
          $region47: #{downsample_forward.1} parent=43 // pred_region
            // Predicated region
            $region49: #{downsample_forward.1} parent=47 // pred_check
              _
            $region50: #{downsample_forward.1} parent=47 // pred_check_branch
              %268 = sbr.rel target = $region52
            $region51: #{downsample_forward.1} parent=47 // pred_region
              // Predicated region
              $region64: #{downsample_forward.1} parent=51 // pred_check
                _
              $region65: #{downsample_forward.1} parent=51 // pred_check_branch
                %346 = sbr.rel (0) target = $region67
              $region66: #{downsample_forward.1} parent=51 // pred_region
                loop: start=0, step=1, limit=1
                $region68: #{downsample_forward.1} parent=66 // loop_pre_header
                  _
                $region69: #{downsample_forward.1} parent=66 // loop_header
                  %s348 = sphi 0, %s352
                  %p349 = scmp.ge.s32.totalorder %s348, 1
                  %s353 = sphi %s264, %s264
                  %s354 = sphi %s261, %s261
                $region70: #{downsample_forward.1} parent=66 // loop_header_branch
                  %351 = sbr.rel (%p349) target = $region74
                $region71: #{downsample_forward.1} parent=66 // loop_body
                  _
                $region72: #{downsample_forward.1} parent=66 // loop_footer
                  %s352 = sadd.s32 1, %s348
                $region73: #{downsample_forward.1} parent=66 // loop_footer_branch
                  %347 = sbr.rel target = $region69
                $region74: #{downsample_forward.1} parent=66 // loop_exit
                  _
                %s356 = ssub.s32 16, 1
                loop: start=0, step=1, limit=1
                $region75: #{downsample_forward.1} parent=66 // loop_pre_header
                  _
                $region76: #{downsample_forward.1} parent=66 // loop_header
                  %s358 = sphi 0, %s362
                  %p359 = scmp.ge.s32.totalorder %s358, 1
                  %s363 = sphi %s264, %s264
                  %s364 = sphi %s261, %s261
                $region77: #{downsample_forward.1} parent=66 // loop_header_branch
                  %361 = sbr.rel (%p359) target = $region81
                $region78: #{downsample_forward.1} parent=66 // loop_body
                  %v365 = vld [vmem:[%s363] sm:%s356]
                  %366 = vst [vmem:[%s364] sm:%s356] %v365
                  %v367 = vld [vmem:[%s363 + $0x4] sm:%s356]
                  %368 = vst [vmem:[%s364 + $0x4] sm:%s356] %v367
                  %v369 = vld [vmem:[%s363 + $0x8] sm:%s356]
                  %370 = vst [vmem:[%s364 + $0x8] sm:%s356] %v369
                  %v371 = vld [vmem:[%s363 + $0xc] sm:%s356]
                  %372 = vst [vmem:[%s364 + $0xc] sm:%s356] %v371
                  %v373 = vld [vmem:[%s363 + $0x10] sm:%s356]
                  %374 = vst [vmem:[%s364 + $0x10] sm:%s356] %v373
                  %v375 = vld [vmem:[%s363 + $0x14] sm:%s356]
                  %376 = vst [vmem:[%s364 + $0x14] sm:%s356] %v375
                  %v377 = vld [vmem:[%s363 + $0x18] sm:%s356]
                  %378 = vst [vmem:[%s364 + $0x18] sm:%s356] %v377
                  %v379 = vld [vmem:[%s363 + $0x1c] sm:%s356]
                  %380 = vst [vmem:[%s364 + $0x1c] sm:%s356] %v379
                  %v381 = vld [vmem:[%s363 + $0x40] sm:%s356]
                  %382 = vst [vmem:[%s364 + $0x20] sm:%s356] %v381
                  %v383 = vld [vmem:[%s363 + $0x44] sm:%s356]
                  %384 = vst [vmem:[%s364 + $0x24] sm:%s356] %v383
                  %v385 = vld [vmem:[%s363 + $0x48] sm:%s356]
                  %386 = vst [vmem:[%s364 + $0x28] sm:%s356] %v385
                  %v387 = vld [vmem:[%s363 + $0x4c] sm:%s356]
                  %388 = vst [vmem:[%s364 + $0x2c] sm:%s356] %v387
                  %v389 = vld [vmem:[%s363 + $0x50] sm:%s356]
                  %390 = vst [vmem:[%s364 + $0x30] sm:%s356] %v389
                  %v391 = vld [vmem:[%s363 + $0x54] sm:%s356]
                  %392 = vst [vmem:[%s364 + $0x34] sm:%s356] %v391
                  %v393 = vld [vmem:[%s363 + $0x58] sm:%s356]
                  %394 = vst [vmem:[%s364 + $0x38] sm:%s356] %v393
                  %v395 = vld [vmem:[%s363 + $0x5c] sm:%s356]
                  %396 = vst [vmem:[%s364 + $0x3c] sm:%s356] %v395
                  %v397 = vld [vmem:[%s363 + $0x80] sm:%s356]
                  %398 = vst [vmem:[%s364 + $0x40] sm:%s356] %v397
                  %v399 = vld [vmem:[%s363 + $0x84] sm:%s356]
                  %400 = vst [vmem:[%s364 + $0x44] sm:%s356] %v399
                  %v401 = vld [vmem:[%s363 + $0x88] sm:%s356]
                  %402 = vst [vmem:[%s364 + $0x48] sm:%s356] %v401
                  %v403 = vld [vmem:[%s363 + $0x8c] sm:%s356]
                  %404 = vst [vmem:[%s364 + $0x4c] sm:%s356] %v403
                  %v405 = vld [vmem:[%s363 + $0x90] sm:%s356]
                  %406 = vst [vmem:[%s364 + $0x50] sm:%s356] %v405
                  %v407 = vld [vmem:[%s363 + $0x94] sm:%s356]
                  %408 = vst [vmem:[%s364 + $0x54] sm:%s356] %v407
                  %v409 = vld [vmem:[%s363 + $0x98] sm:%s356]
                  %410 = vst [vmem:[%s364 + $0x58] sm:%s356] %v409
                  %v411 = vld [vmem:[%s363 + $0x9c] sm:%s356]
                  %412 = vst [vmem:[%s364 + $0x5c] sm:%s356] %v411
                  %v413 = vld [vmem:[%s363 + $0xc0] sm:%s356]
                  %414 = vst [vmem:[%s364 + $0x60] sm:%s356] %v413
                  %v415 = vld [vmem:[%s363 + $0xc4] sm:%s356]
                  %416 = vst [vmem:[%s364 + $0x64] sm:%s356] %v415
                  %v417 = vld [vmem:[%s363 + $0xc8] sm:%s356]
                  %418 = vst [vmem:[%s364 + $0x68] sm:%s356] %v417
                  %v419 = vld [vmem:[%s363 + $0xcc] sm:%s356]
                  %420 = vst [vmem:[%s364 + $0x6c] sm:%s356] %v419
                  %v421 = vld [vmem:[%s363 + $0xd0] sm:%s356]
                  %422 = vst [vmem:[%s364 + $0x70] sm:%s356] %v421
                  %v423 = vld [vmem:[%s363 + $0xd4] sm:%s356]
                  %424 = vst [vmem:[%s364 + $0x74] sm:%s356] %v423
                  %v425 = vld [vmem:[%s363 + $0xd8] sm:%s356]
                  %426 = vst [vmem:[%s364 + $0x78] sm:%s356] %v425
                  %v427 = vld [vmem:[%s363 + $0xdc] sm:%s356]
                  %428 = vst [vmem:[%s364 + $0x7c] sm:%s356] %v427
                $region79: #{downsample_forward.1} parent=66 // loop_footer
                  %s362 = sadd.s32 1, %s358
                $region80: #{downsample_forward.1} parent=66 // loop_footer_branch
                  %357 = sbr.rel target = $region76
                $region81: #{downsample_forward.1} parent=66 // loop_exit
                  _
              $region67: #{downsample_forward.1} parent=51 // pred_fallthru
                _
            $region52: #{downsample_forward.1} parent=47 // pred_fallthru
              _
            // Predicated region
            $region53: #{downsample_forward.1} parent=47 // pred_check
              _
            $region54: #{downsample_forward.1} parent=47 // pred_check_branch
              %270 = sbr.rel (0) target = $region56
            $region55: #{downsample_forward.1} parent=47 // pred_region
              %s272 = ssub.s32 16, 1
              loop: start=0, step=1, limit=1
              $region57: #{downsample_forward.1} parent=55 // loop_pre_header
                _
              $region58: #{downsample_forward.1} parent=55 // loop_header
                %s274 = sphi 0, %s278
                %p275 = scmp.ge.s32.totalorder %s274, 1
                %s279 = sphi %s264, %s264
                %s280 = sphi %s261, %s261
              $region59: #{downsample_forward.1} parent=55 // loop_header_branch
                %277 = sbr.rel (%p275) target = $region63
              $region60: #{downsample_forward.1} parent=55 // loop_body
                %v281 = vld [vmem:[%s279] sm:%s272]
                %282 = vst [vmem:[%s280] sm:%s272] %v281
                %v283 = vld [vmem:[%s279 + $0x4] sm:%s272]
                %284 = vst [vmem:[%s280 + $0x4] sm:%s272] %v283
                %v285 = vld [vmem:[%s279 + $0x8] sm:%s272]
                %286 = vst [vmem:[%s280 + $0x8] sm:%s272] %v285
                %v287 = vld [vmem:[%s279 + $0xc] sm:%s272]
                %288 = vst [vmem:[%s280 + $0xc] sm:%s272] %v287
                %v289 = vld [vmem:[%s279 + $0x10] sm:%s272]
                %290 = vst [vmem:[%s280 + $0x10] sm:%s272] %v289
                %v291 = vld [vmem:[%s279 + $0x14] sm:%s272]
                %292 = vst [vmem:[%s280 + $0x14] sm:%s272] %v291
                %v293 = vld [vmem:[%s279 + $0x18] sm:%s272]
                %294 = vst [vmem:[%s280 + $0x18] sm:%s272] %v293
                %v295 = vld [vmem:[%s279 + $0x1c] sm:%s272]
                %296 = vst [vmem:[%s280 + $0x1c] sm:%s272] %v295
                %v297 = vld [vmem:[%s279 + $0x40] sm:%s272]
                %298 = vst [vmem:[%s280 + $0x20] sm:%s272] %v297
                %v299 = vld [vmem:[%s279 + $0x44] sm:%s272]
                %300 = vst [vmem:[%s280 + $0x24] sm:%s272] %v299
                %v301 = vld [vmem:[%s279 + $0x48] sm:%s272]
                %302 = vst [vmem:[%s280 + $0x28] sm:%s272] %v301
                %v303 = vld [vmem:[%s279 + $0x4c] sm:%s272]
                %304 = vst [vmem:[%s280 + $0x2c] sm:%s272] %v303
                %v305 = vld [vmem:[%s279 + $0x50] sm:%s272]
                %306 = vst [vmem:[%s280 + $0x30] sm:%s272] %v305
                %v307 = vld [vmem:[%s279 + $0x54] sm:%s272]
                %308 = vst [vmem:[%s280 + $0x34] sm:%s272] %v307
                %v309 = vld [vmem:[%s279 + $0x58] sm:%s272]
                %310 = vst [vmem:[%s280 + $0x38] sm:%s272] %v309
                %v311 = vld [vmem:[%s279 + $0x5c] sm:%s272]
                %312 = vst [vmem:[%s280 + $0x3c] sm:%s272] %v311
                %v313 = vld [vmem:[%s279 + $0x80] sm:%s272]
                %314 = vst [vmem:[%s280 + $0x40] sm:%s272] %v313
                %v315 = vld [vmem:[%s279 + $0x84] sm:%s272]
                %316 = vst [vmem:[%s280 + $0x44] sm:%s272] %v315
                %v317 = vld [vmem:[%s279 + $0x88] sm:%s272]
                %318 = vst [vmem:[%s280 + $0x48] sm:%s272] %v317
                %v319 = vld [vmem:[%s279 + $0x8c] sm:%s272]
                %320 = vst [vmem:[%s280 + $0x4c] sm:%s272] %v319
                %v321 = vld [vmem:[%s279 + $0x90] sm:%s272]
                %322 = vst [vmem:[%s280 + $0x50] sm:%s272] %v321
                %v323 = vld [vmem:[%s279 + $0x94] sm:%s272]
                %324 = vst [vmem:[%s280 + $0x54] sm:%s272] %v323
                %v325 = vld [vmem:[%s279 + $0x98] sm:%s272]
                %326 = vst [vmem:[%s280 + $0x58] sm:%s272] %v325
                %v327 = vld [vmem:[%s279 + $0x9c] sm:%s272]
                %328 = vst [vmem:[%s280 + $0x5c] sm:%s272] %v327
                %v329 = vld [vmem:[%s279 + $0xc0] sm:%s272]
                %330 = vst [vmem:[%s280 + $0x60] sm:%s272] %v329
                %v331 = vld [vmem:[%s279 + $0xc4] sm:%s272]
                %332 = vst [vmem:[%s280 + $0x64] sm:%s272] %v331
                %v333 = vld [vmem:[%s279 + $0xc8] sm:%s272]
                %334 = vst [vmem:[%s280 + $0x68] sm:%s272] %v333
                %v335 = vld [vmem:[%s279 + $0xcc] sm:%s272]
                %336 = vst [vmem:[%s280 + $0x6c] sm:%s272] %v335
                %v337 = vld [vmem:[%s279 + $0xd0] sm:%s272]
                %338 = vst [vmem:[%s280 + $0x70] sm:%s272] %v337
                %v339 = vld [vmem:[%s279 + $0xd4] sm:%s272]
                %340 = vst [vmem:[%s280 + $0x74] sm:%s272] %v339
                %v341 = vld [vmem:[%s279 + $0xd8] sm:%s272]
                %342 = vst [vmem:[%s280 + $0x78] sm:%s272] %v341
                %v343 = vld [vmem:[%s279 + $0xdc] sm:%s272]
                %344 = vst [vmem:[%s280 + $0x7c] sm:%s272] %v343
              $region61: #{downsample_forward.1} parent=55 // loop_footer
                %s278 = sadd.s32 1, %s274
              $region62: #{downsample_forward.1} parent=55 // loop_footer_branch
                %273 = sbr.rel target = $region58
              $region63: #{downsample_forward.1} parent=55 // loop_exit
                _
            $region56: #{downsample_forward.1} parent=47 // pred_fallthru
              _
          $region48: #{downsample_forward.1} parent=43 // pred_fallthru
            _
          %429 = vnop
        $region44: #{downsample_forward.1} parent=39 // pred_fallthru
          _
        // Predicated region
        $region82: #{downsample_forward.1} parent=39 // pred_check
          %p430 = pneg %p60
        $region83: #{downsample_forward.1} parent=39 // pred_check_branch
          %432 = sbr.rel (%p430) target = $region85
        $region84: #{downsample_forward.1} parent=39 // pred_region
          %p433 = scmp.lt.s32.totalorder %s14, 1
          %s434 = scalar_select %p433, %s14, 1
          %s435 = smul.addr %s434, 2
          %s436 = smul.addr %s435, 4
          %s437 = scalar_lea.vmem %s1, %s436
        $region85: #{downsample_forward.1} parent=39 // pred_fallthru
          _
      $region40: #{downsample_forward.1} parent=5 // pred_fallthru
        _
      %p438 = scmp.le.s32.totalorder 1, %s14
      %p439 = scmp.lt.s32.totalorder %s14, 3
      %p440 = pnand %p438, %p439
      %p441 = pneg %p440
      // Predicated region
      $region86: #{downsample_forward.1} parent=5 // pred_check
        _
      $region87: #{downsample_forward.1} parent=5 // pred_check_branch
        %443 = sbr.rel (%p440) target = $region89
      $region88: #{downsample_forward.1} parent=5 // pred_region
        %s444 = ssub.s32 %s14, 1
        %s445 = sand.u32 %s27, 1
        %s446 = sand.u32 %s27, 1
        %s447 = smul.addr %s446, 128
        %s448 = scalar_lea.vmem [#allocation2], %s447
        // Predicated region
        $region90: #{downsample_forward.1} parent=88 // pred_check
          %p449 = pneg %p40
        $region91: #{downsample_forward.1} parent=88 // pred_check_branch
          %451 = sbr.rel (%p449) target = $region93
        $region92: #{downsample_forward.1} parent=88 // pred_region
          _
        $region93: #{downsample_forward.1} parent=88 // pred_fallthru
          _
        %s452 = sand.u32 %s27, 1
        %s453 = sand.u32 %s27, 1
        %s454 = smul.addr %s453, 128
        %s455 = scalar_lea.vmem [#allocation2], %s454
        %p456 = pneg %p40
        %p457 = pneg %p37
        %p458 = scmp.lt.s32.totalorder %s19, 1
        %s459 = scalar_select %p458, %s19, 1
        %s460 = smul.addr %s459, 2
        %s461 = smul.addr %s460, 4
        %s462 = scalar_lea.vmem %s1, %s461
        %p463 = pneg %p66
        %p464 = pneg %p63
        %p465 = pneg %p87
        %p466 = pneg %p84
        %p467 = pneg %p108
        %p468 = pneg %p105
        %p469 = pneg %p129
        %p470 = pneg %p126
        %p471 = pneg %p150
        %p472 = pneg %p147
        %p473 = pneg %p171
        %p474 = pneg %p168
        %p475 = pneg %p192
        %p476 = pneg %p189
        %p477 = pneg %p218
        %p478 = pneg %p215
        %s479 = smul.u32 8, %s19
        %p480 = scmp.lt.s32.totalorder %s479, 15
        %s481 = scalar_select %p480, %s479, 15
        %s482 = smul.addr %s481, 4
        %s483 = scalar_lea.vmem %s8, %s482
        %s484 = smul.u32 8, %s19
        %p485 = scmp.lt.s32.totalorder %s19, 1
        %s486 = scalar_select %p485, %s19, 1
        %s487 = smul.addr %s486, 2
        %s488 = smul.addr %s487, 4
        %s489 = scalar_lea.vmem %s1, %s488
        %s490 = smul.u32 8, %s19
        %p491 = scmp.lt.s32.totalorder %s490, 15
        %s492 = scalar_select %p491, %s490, 15
        %s493 = smul.addr %s492, 4
        %s494 = scalar_lea.vmem %s8, %s493
        %s495 = smul.u32 8, %s19
        %v499 = vld [vmem:[%s448] sm:$0xf]
        %v500 = vld [vmem:[%s448 + $0x4] sm:$0xf]
        %v501 = vld [vmem:[%s448 + $0x8] sm:$0xf]
        %v502 = vld [vmem:[%s448 + $0xc] sm:$0xf]
        %v503 = vld [vmem:[%s448 + $0x10] sm:$0xf]
        %v504 = vld [vmem:[%s448 + $0x14] sm:$0xf]
        %v505 = vld [vmem:[%s448 + $0x18] sm:$0xf]
        %v506 = vld [vmem:[%s448 + $0x1c] sm:$0xf]
        %s507 = scalar_lea.vmem %s448, 32 [#allocation2]
        %v508 = vld [vmem:[%s507] sm:$0xf]
        %v509 = vld [vmem:[%s507 + $0x4] sm:$0xf]
        %v510 = vld [vmem:[%s507 + $0x8] sm:$0xf]
        %v511 = vld [vmem:[%s507 + $0xc] sm:$0xf]
        %v512 = vld [vmem:[%s507 + $0x10] sm:$0xf]
        %v513 = vld [vmem:[%s507 + $0x14] sm:$0xf]
        %v514 = vld [vmem:[%s507 + $0x18] sm:$0xf]
        %v515 = vld [vmem:[%s507 + $0x1c] sm:$0xf]
        %s516 = scalar_lea.vmem %s448, 64 [#allocation2]
        %v517 = vld [vmem:[%s516] sm:$0xf]
        %v518 = vld [vmem:[%s516 + $0x4] sm:$0xf]
        %v519 = vld [vmem:[%s516 + $0x8] sm:$0xf]
        %v520 = vld [vmem:[%s516 + $0xc] sm:$0xf]
        %v521 = vld [vmem:[%s516 + $0x10] sm:$0xf]
        %v522 = vld [vmem:[%s516 + $0x14] sm:$0xf]
        %v523 = vld [vmem:[%s516 + $0x18] sm:$0xf]
        %v524 = vld [vmem:[%s516 + $0x1c] sm:$0xf]
        %s525 = scalar_lea.vmem %s448, 96 [#allocation2]
        %v526 = vld [vmem:[%s525] sm:$0xf]
        %v527 = vld [vmem:[%s525 + $0x4] sm:$0xf]
        %v528 = vld [vmem:[%s525 + $0x8] sm:$0xf]
        %v529 = vld [vmem:[%s525 + $0xc] sm:$0xf]
        %v530 = vld [vmem:[%s525 + $0x10] sm:$0xf]
        %v531 = vld [vmem:[%s525 + $0x14] sm:$0xf]
        %v532 = vld [vmem:[%s525 + $0x18] sm:$0xf]
        %v533 = vld [vmem:[%s525 + $0x1c] sm:$0xf]
        %v534 = vunpack.c.l.bf16 %v499
        %v535 = vunpack.c.l.bf16 %v500
        %v536 = vunpack.c.l.bf16 %v501
        %v537 = vunpack.c.l.bf16 %v502
        %v538 = vunpack.c.l.bf16 %v503
        %v539 = vunpack.c.l.bf16 %v504
        %v540 = vunpack.c.l.bf16 %v505
        %v541 = vunpack.c.l.bf16 %v506
        %v542 = vunpack.c.l.bf16 %v508
        %v543 = vunpack.c.l.bf16 %v509
        %v544 = vunpack.c.l.bf16 %v510
        %v545 = vunpack.c.l.bf16 %v511
        %v546 = vunpack.c.l.bf16 %v512
        %v547 = vunpack.c.l.bf16 %v513
        %v548 = vunpack.c.l.bf16 %v514
        %v549 = vunpack.c.l.bf16 %v515
        %v550 = vmax.f32 %v534, %v542
        %v551 = vmax.f32 %v535, %v543
        %v552 = vmax.f32 %v536, %v544
        %v553 = vmax.f32 %v537, %v545
        %v554 = vmax.f32 %v538, %v546
        %v555 = vmax.f32 %v539, %v547
        %v556 = vmax.f32 %v540, %v548
        %v557 = vmax.f32 %v541, %v549
        %v558 = vpack.c.bf16 %v550, %v550
        %v559 = vpack.c.bf16 %v551, %v551
        %v560 = vpack.c.bf16 %v552, %v552
        %v561 = vpack.c.bf16 %v553, %v553
        %v562 = vpack.c.bf16 %v554, %v554
        %v563 = vpack.c.bf16 %v555, %v555
        %v564 = vpack.c.bf16 %v556, %v556
        %v565 = vpack.c.bf16 %v557, %v557
        %v566 = vunpack.c.l.bf16 %v517
        %v567 = vunpack.c.l.bf16 %v518
        %v568 = vunpack.c.l.bf16 %v519
        %v569 = vunpack.c.l.bf16 %v520
        %v570 = vunpack.c.l.bf16 %v521
        %v571 = vunpack.c.l.bf16 %v522
        %v572 = vunpack.c.l.bf16 %v523
        %v573 = vunpack.c.l.bf16 %v524
        %v574 = vunpack.c.l.bf16 %v526
        %v575 = vunpack.c.l.bf16 %v527
        %v576 = vunpack.c.l.bf16 %v528
        %v577 = vunpack.c.l.bf16 %v529
        %v578 = vunpack.c.l.bf16 %v530
        %v579 = vunpack.c.l.bf16 %v531
        %v580 = vunpack.c.l.bf16 %v532
        %v581 = vunpack.c.l.bf16 %v533
        %v582 = vmax.f32 %v566, %v574
        %v583 = vmax.f32 %v567, %v575
        %v584 = vmax.f32 %v568, %v576
        %v585 = vmax.f32 %v569, %v577
        %v586 = vmax.f32 %v570, %v578
        %v587 = vmax.f32 %v571, %v579
        %v588 = vmax.f32 %v572, %v580
        %v589 = vmax.f32 %v573, %v581
        %v590 = vpack.c.bf16 %v582, %v582
        %v591 = vpack.c.bf16 %v583, %v583
        %v592 = vpack.c.bf16 %v584, %v584
        %v593 = vpack.c.bf16 %v585, %v585
        %v594 = vpack.c.bf16 %v586, %v586
        %v595 = vpack.c.bf16 %v587, %v587
        %v596 = vpack.c.bf16 %v588, %v588
        %v597 = vpack.c.bf16 %v589, %v589
        %v598 = vunpack.c.l.bf16 %v558
        %v599 = vunpack.c.l.bf16 %v559
        %v600 = vunpack.c.l.bf16 %v560
        %v601 = vunpack.c.l.bf16 %v561
        %v602 = vunpack.c.l.bf16 %v562
        %v603 = vunpack.c.l.bf16 %v563
        %v604 = vunpack.c.l.bf16 %v564
        %v605 = vunpack.c.l.bf16 %v565
        %v606 = vunpack.c.l.bf16 %v590
        %v607 = vunpack.c.l.bf16 %v591
        %v608 = vunpack.c.l.bf16 %v592
        %v609 = vunpack.c.l.bf16 %v593
        %v610 = vunpack.c.l.bf16 %v594
        %v611 = vunpack.c.l.bf16 %v595
        %v612 = vunpack.c.l.bf16 %v596
        %v613 = vunpack.c.l.bf16 %v597
        %v614 = vmax.f32 %v598, %v606
        %v615 = vmax.f32 %v599, %v607
        %v616 = vmax.f32 %v600, %v608
        %v617 = vmax.f32 %v601, %v609
        %v618 = vmax.f32 %v602, %v610
        %v619 = vmax.f32 %v603, %v611
        %v620 = vmax.f32 %v604, %v612
        %v621 = vmax.f32 %v605, %v613
        %v622 = vpack.c.bf16 %v615, %v614
        %v623 = vpack.c.bf16 %v617, %v616
        %v624 = vpack.c.bf16 %v619, %v618
        %v625 = vpack.c.bf16 %v621, %v620
        %v626 = vld [vmem:[%s2] sm:$0xf]
        %v627 = vld [vmem:[%s3] sm:$0x1]
        %v629 = vperm.slane %v627, 0
        %vm631 = vcmask 64512
        %v633 = vsel %vm631, %v622, 0
        %v636 = vsel %vm631, %v623, 0
        %v639 = vsel %vm631, %v624, 0
        %v642 = vsel %vm631, %v625, 0
        %vm644 = vcmask 1043456
        %v646 = vsel %vm644, %v626, 0
        %648 = vmatpush.bf16.msra.mxu0 0
        %649 = vmatpush.bf16.msra.mxu0 0
        %650 = vmatpush.bf16.msra.mxu0 0
        %651 = vmatpush.bf16.msra.mxu0 0
        %652 = vmatpush.bf16.msra.mxu0 0
        %653 = vmatpush.bf16.msra.mxu0 0
        %654 = vmatpush.bf16.msra.mxu0 0
        %655 = vmatpush.bf16.msra.mxu0 %v646
        %656 = vmatmul.bf16.gmra.mxu0 %v633
        %v657 = vpop.f32.mrf.mxu0
        %v658 = vadd.f32 %v629, %v657
        %v659 = vpop.f32.mrf.mxu0
        %v660 = vadd.f32 %v629, %v659
        %661 = vmatmul.bf16.gmra.mxu0 %v636
        %v662 = vpop.f32.mrf.mxu0
        %v663 = vadd.f32 %v629, %v662
        %v664 = vpop.f32.mrf.mxu0
        %v665 = vadd.f32 %v629, %v664
        %666 = vmatmul.bf16.gmra.mxu0 %v639
        %v667 = vpop.f32.mrf.mxu0
        %v668 = vadd.f32 %v629, %v667
        %v669 = vpop.f32.mrf.mxu0
        %v670 = vadd.f32 %v629, %v669
        %671 = vmatmul.bf16.gmra.mxu0 %v642
        %v672 = vpop.f32.mrf.mxu0
        %v673 = vadd.f32 %v629, %v672
        %v674 = vpop.f32.mrf.mxu0
        %v675 = vadd.f32 %v629, %v674
        %676 = vdwg.mxu0
        %v677 = vsub.f32 0.0, %v658
        %v678 = vsub.f32 0.0, %v660
        %v679 = vsub.f32 0.0, %v663
        %v680 = vsub.f32 0.0, %v665
        %v681 = vsub.f32 0.0, %v668
        %v682 = vsub.f32 0.0, %v670
        %v683 = vsub.f32 0.0, %v673
        %v684 = vsub.f32 0.0, %v675
        %v685 = vmul.f32 %v677, 1.442695
        %v686 = vpow.pop %v685
        %v687 = vmul.f32 %v678, 1.442695
        %v688 = vpow.pop %v687
        %v689 = vmul.f32 %v679, 1.442695
        %v690 = vpow.pop %v689
        %v691 = vmul.f32 %v680, 1.442695
        %v692 = vpow.pop %v691
        %v693 = vmul.f32 %v681, 1.442695
        %v694 = vpow.pop %v693
        %v695 = vmul.f32 %v682, 1.442695
        %v696 = vpow.pop %v695
        %v697 = vmul.f32 %v683, 1.442695
        %v698 = vpow.pop %v697
        %v699 = vmul.f32 %v684, 1.442695
        %v700 = vpow.pop %v699
        %v701 = vadd.f32 %v686, 1.0
        %v702 = vadd.f32 %v688, 1.0
        %v703 = vadd.f32 %v690, 1.0
        %v704 = vadd.f32 %v692, 1.0
        %v705 = vadd.f32 %v694, 1.0
        %v706 = vadd.f32 %v696, 1.0
        %v707 = vadd.f32 %v698, 1.0
        %v708 = vadd.f32 %v700, 1.0
        %v709 = vrcp.pop %v701
        %v710 = vrcp.pop %v702
        %v711 = vrcp.pop %v703
        %v712 = vrcp.pop %v704
        %v713 = vrcp.pop %v705
        %v714 = vrcp.pop %v706
        %v715 = vrcp.pop %v707
        %v716 = vrcp.pop %v708
        %v717 = vmul.f32 %v658, %v709
        %v718 = vmul.f32 %v660, %v710
        %v719 = vmul.f32 %v663, %v711
        %v720 = vmul.f32 %v665, %v712
        %v721 = vmul.f32 %v668, %v713
        %v722 = vmul.f32 %v670, %v714
        %v723 = vmul.f32 %v673, %v715
        %v724 = vmul.f32 %v675, %v716
        %v725 = vld [vmem:[%s4] sm:$0xf]
        %v726 = vld [vmem:[%s5] sm:$0x1]
        %v728 = vperm.slane %v726, 0
        %v738 = vunpack.c.l.b16 %v499
        %v739 = vunpack.c.l.b16 %v500
        %v740 = vunpack.c.l.b16 %v501
        %v741 = vunpack.c.l.b16 %v502
        %v742 = vunpack.c.l.b16 %v503
        %v743 = vunpack.c.l.b16 %v504
        %v744 = vunpack.c.l.b16 %v505
        %v745 = vunpack.c.l.b16 %v506
        %v746 = vpack.c.b16 %v739, %v738
        %v747 = vpack.c.b16 %v741, %v740
        %v748 = vpack.c.b16 %v743, %v742
        %v749 = vpack.c.b16 %v745, %v744
        %v751 = vsel %vm631, %v746, 0
        %v754 = vsel %vm631, %v747, 0
        %v757 = vsel %vm631, %v748, 0
        %v760 = vsel %vm631, %v749, 0
        %v763 = vsel %vm644, %v725, 0
        %765 = vmatpush.bf16.msra.mxu0 0
        %766 = vmatpush.bf16.msra.mxu0 0
        %767 = vmatpush.bf16.msra.mxu0 0
        %768 = vmatpush.bf16.msra.mxu0 0
        %769 = vmatpush.bf16.msra.mxu0 0
        %770 = vmatpush.bf16.msra.mxu0 0
        %771 = vmatpush.bf16.msra.mxu0 0
        %772 = vmatpush.bf16.msra.mxu0 %v763
        %773 = vmatmul.bf16.gmra.mxu0 %v751
        %v774 = vpop.f32.mrf.mxu0
        %v775 = vadd.f32 %v728, %v774
        %v776 = vpop.f32.mrf.mxu0
        %v777 = vadd.f32 %v728, %v776
        %778 = vmatmul.bf16.gmra.mxu0 %v754
        %v779 = vpop.f32.mrf.mxu0
        %v780 = vadd.f32 %v728, %v779
        %v781 = vpop.f32.mrf.mxu0
        %v782 = vadd.f32 %v728, %v781
        %783 = vmatmul.bf16.gmra.mxu0 %v757
        %v784 = vpop.f32.mrf.mxu0
        %v785 = vadd.f32 %v728, %v784
        %v786 = vpop.f32.mrf.mxu0
        %v787 = vadd.f32 %v728, %v786
        %788 = vmatmul.bf16.gmra.mxu0 %v760
        %v789 = vpop.f32.mrf.mxu0
        %v790 = vadd.f32 %v728, %v789
        %v791 = vpop.f32.mrf.mxu0
        %v792 = vadd.f32 %v728, %v791
        %793 = vdwg.mxu0
        %v794 = vsub.f32 0.0, %v775
        %v795 = vsub.f32 0.0, %v777
        %v796 = vsub.f32 0.0, %v780
        %v797 = vsub.f32 0.0, %v782
        %v798 = vsub.f32 0.0, %v785
        %v799 = vsub.f32 0.0, %v787
        %v800 = vsub.f32 0.0, %v790
        %v801 = vsub.f32 0.0, %v792
        %v802 = vmul.f32 %v794, 1.442695
        %v803 = vpow.pop %v802
        %v804 = vmul.f32 %v795, 1.442695
        %v805 = vpow.pop %v804
        %v806 = vmul.f32 %v796, 1.442695
        %v807 = vpow.pop %v806
        %v808 = vmul.f32 %v797, 1.442695
        %v809 = vpow.pop %v808
        %v810 = vmul.f32 %v798, 1.442695
        %v811 = vpow.pop %v810
        %v812 = vmul.f32 %v799, 1.442695
        %v813 = vpow.pop %v812
        %v814 = vmul.f32 %v800, 1.442695
        %v815 = vpow.pop %v814
        %v816 = vmul.f32 %v801, 1.442695
        %v817 = vpow.pop %v816
        %v818 = vadd.f32 %v803, 1.0
        %v819 = vadd.f32 %v805, 1.0
        %v820 = vadd.f32 %v807, 1.0
        %v821 = vadd.f32 %v809, 1.0
        %v822 = vadd.f32 %v811, 1.0
        %v823 = vadd.f32 %v813, 1.0
        %v824 = vadd.f32 %v815, 1.0
        %v825 = vadd.f32 %v817, 1.0
        %v826 = vrcp.pop %v818
        %v827 = vrcp.pop %v819
        %v828 = vrcp.pop %v820
        %v829 = vrcp.pop %v821
        %v830 = vrcp.pop %v822
        %v831 = vrcp.pop %v823
        %v832 = vrcp.pop %v824
        %v833 = vrcp.pop %v825
        %v834 = vmul.f32 %v775, %v826
        %v835 = vmul.f32 %v777, %v827
        %v836 = vmul.f32 %v780, %v828
        %v837 = vmul.f32 %v782, %v829
        %v838 = vmul.f32 %v785, %v830
        %v839 = vmul.f32 %v787, %v831
        %v840 = vmul.f32 %v790, %v832
        %v841 = vmul.f32 %v792, %v833
        %v842 = vpack.c.bf16 %v835, %v834
        %v843 = vpack.c.bf16 %v837, %v836
        %v844 = vpack.c.bf16 %v839, %v838
        %v845 = vpack.c.bf16 %v841, %v840
        %v854 = vunpack.c.l.b16 %v508
        %v855 = vunpack.c.l.b16 %v509
        %v856 = vunpack.c.l.b16 %v510
        %v857 = vunpack.c.l.b16 %v511
        %v858 = vunpack.c.l.b16 %v512
        %v859 = vunpack.c.l.b16 %v513
        %v860 = vunpack.c.l.b16 %v514
        %v861 = vunpack.c.l.b16 %v515
        %v862 = vpack.c.b16 %v855, %v854
        %v863 = vpack.c.b16 %v857, %v856
        %v864 = vpack.c.b16 %v859, %v858
        %v865 = vpack.c.b16 %v861, %v860
        %v867 = vsel %vm631, %v862, 0
        %v870 = vsel %vm631, %v863, 0
        %v873 = vsel %vm631, %v864, 0
        %v876 = vsel %vm631, %v865, 0
        %878 = vmatpush.bf16.msra.mxu0 0
        %879 = vmatpush.bf16.msra.mxu0 0
        %880 = vmatpush.bf16.msra.mxu0 0
        %881 = vmatpush.bf16.msra.mxu0 0
        %882 = vmatpush.bf16.msra.mxu0 0
        %883 = vmatpush.bf16.msra.mxu0 0
        %884 = vmatpush.bf16.msra.mxu0 0
        %885 = vmatpush.bf16.msra.mxu0 %v763
        %886 = vmatmul.bf16.gmra.mxu0 %v867
        %v887 = vpop.f32.mrf.mxu0
        %v888 = vadd.f32 %v728, %v887
        %v889 = vpop.f32.mrf.mxu0
        %v890 = vadd.f32 %v728, %v889
        %891 = vmatmul.bf16.gmra.mxu0 %v870
        %v892 = vpop.f32.mrf.mxu0
        %v893 = vadd.f32 %v728, %v892
        %v894 = vpop.f32.mrf.mxu0
        %v895 = vadd.f32 %v728, %v894
        %896 = vmatmul.bf16.gmra.mxu0 %v873
        %v897 = vpop.f32.mrf.mxu0
        %v898 = vadd.f32 %v728, %v897
        %v899 = vpop.f32.mrf.mxu0
        %v900 = vadd.f32 %v728, %v899
        %901 = vmatmul.bf16.gmra.mxu0 %v876
        %v902 = vpop.f32.mrf.mxu0
        %v903 = vadd.f32 %v728, %v902
        %v904 = vpop.f32.mrf.mxu0
        %v905 = vadd.f32 %v728, %v904
        %906 = vdwg.mxu0
        %v907 = vsub.f32 0.0, %v888
        %v908 = vsub.f32 0.0, %v890
        %v909 = vsub.f32 0.0, %v893
        %v910 = vsub.f32 0.0, %v895
        %v911 = vsub.f32 0.0, %v898
        %v912 = vsub.f32 0.0, %v900
        %v913 = vsub.f32 0.0, %v903
        %v914 = vsub.f32 0.0, %v905
        %v915 = vmul.f32 %v907, 1.442695
        %v916 = vpow.pop %v915
        %v917 = vmul.f32 %v908, 1.442695
        %v918 = vpow.pop %v917
        %v919 = vmul.f32 %v909, 1.442695
        %v920 = vpow.pop %v919
        %v921 = vmul.f32 %v910, 1.442695
        %v922 = vpow.pop %v921
        %v923 = vmul.f32 %v911, 1.442695
        %v924 = vpow.pop %v923
        %v925 = vmul.f32 %v912, 1.442695
        %v926 = vpow.pop %v925
        %v927 = vmul.f32 %v913, 1.442695
        %v928 = vpow.pop %v927
        %v929 = vmul.f32 %v914, 1.442695
        %v930 = vpow.pop %v929
        %v931 = vadd.f32 %v916, 1.0
        %v932 = vadd.f32 %v918, 1.0
        %v933 = vadd.f32 %v920, 1.0
        %v934 = vadd.f32 %v922, 1.0
        %v935 = vadd.f32 %v924, 1.0
        %v936 = vadd.f32 %v926, 1.0
        %v937 = vadd.f32 %v928, 1.0
        %v938 = vadd.f32 %v930, 1.0
        %v939 = vrcp.pop %v931
        %v940 = vrcp.pop %v932
        %v941 = vrcp.pop %v933
        %v942 = vrcp.pop %v934
        %v943 = vrcp.pop %v935
        %v944 = vrcp.pop %v936
        %v945 = vrcp.pop %v937
        %v946 = vrcp.pop %v938
        %v947 = vmul.f32 %v888, %v939
        %v948 = vmul.f32 %v890, %v940
        %v949 = vmul.f32 %v893, %v941
        %v950 = vmul.f32 %v895, %v942
        %v951 = vmul.f32 %v898, %v943
        %v952 = vmul.f32 %v900, %v944
        %v953 = vmul.f32 %v903, %v945
        %v954 = vmul.f32 %v905, %v946
        %v955 = vpack.c.bf16 %v947, %v947
        %v956 = vpack.c.bf16 %v948, %v948
        %v957 = vpack.c.bf16 %v949, %v949
        %v958 = vpack.c.bf16 %v950, %v950
        %v959 = vpack.c.bf16 %v951, %v951
        %v960 = vpack.c.bf16 %v952, %v952
        %v961 = vpack.c.bf16 %v953, %v953
        %v962 = vpack.c.bf16 %v954, %v954
        %v971 = vunpack.c.l.b16 %v517
        %v972 = vunpack.c.l.b16 %v518
        %v973 = vunpack.c.l.b16 %v519
        %v974 = vunpack.c.l.b16 %v520
        %v975 = vunpack.c.l.b16 %v521
        %v976 = vunpack.c.l.b16 %v522
        %v977 = vunpack.c.l.b16 %v523
        %v978 = vunpack.c.l.b16 %v524
        %v979 = vpack.c.b16 %v972, %v971
        %v980 = vpack.c.b16 %v974, %v973
        %v981 = vpack.c.b16 %v976, %v975
        %v982 = vpack.c.b16 %v978, %v977
        %v984 = vsel %vm631, %v979, 0
        %v987 = vsel %vm631, %v980, 0
        %v990 = vsel %vm631, %v981, 0
        %v993 = vsel %vm631, %v982, 0
        %995 = vmatpush.bf16.msra.mxu0 0
        %996 = vmatpush.bf16.msra.mxu0 0
        %997 = vmatpush.bf16.msra.mxu0 0
        %998 = vmatpush.bf16.msra.mxu0 0
        %999 = vmatpush.bf16.msra.mxu0 0
        %1000 = vmatpush.bf16.msra.mxu0 0
        %1001 = vmatpush.bf16.msra.mxu0 0
        %1002 = vmatpush.bf16.msra.mxu0 %v763
        %1003 = vmatmul.bf16.gmra.mxu0 %v984
        %v1004 = vpop.f32.mrf.mxu0
        %v1005 = vadd.f32 %v728, %v1004
        %v1006 = vpop.f32.mrf.mxu0
        %v1007 = vadd.f32 %v728, %v1006
        %1008 = vmatmul.bf16.gmra.mxu0 %v987
        %v1009 = vpop.f32.mrf.mxu0
        %v1010 = vadd.f32 %v728, %v1009
        %v1011 = vpop.f32.mrf.mxu0
        %v1012 = vadd.f32 %v728, %v1011
        %1013 = vmatmul.bf16.gmra.mxu0 %v990
        %v1014 = vpop.f32.mrf.mxu0
        %v1015 = vadd.f32 %v728, %v1014
        %v1016 = vpop.f32.mrf.mxu0
        %v1017 = vadd.f32 %v728, %v1016
        %1018 = vmatmul.bf16.gmra.mxu0 %v993
        %v1019 = vpop.f32.mrf.mxu0
        %v1020 = vadd.f32 %v728, %v1019
        %v1021 = vpop.f32.mrf.mxu0
        %v1022 = vadd.f32 %v728, %v1021
        %1023 = vdwg.mxu0
        %v1024 = vsub.f32 0.0, %v1005
        %v1025 = vsub.f32 0.0, %v1007
        %v1026 = vsub.f32 0.0, %v1010
        %v1027 = vsub.f32 0.0, %v1012
        %v1028 = vsub.f32 0.0, %v1015
        %v1029 = vsub.f32 0.0, %v1017
        %v1030 = vsub.f32 0.0, %v1020
        %v1031 = vsub.f32 0.0, %v1022
        %v1032 = vmul.f32 %v1024, 1.442695
        %v1033 = vpow.pop %v1032
        %v1034 = vmul.f32 %v1025, 1.442695
        %v1035 = vpow.pop %v1034
        %v1036 = vmul.f32 %v1026, 1.442695
        %v1037 = vpow.pop %v1036
        %v1038 = vmul.f32 %v1027, 1.442695
        %v1039 = vpow.pop %v1038
        %v1040 = vmul.f32 %v1028, 1.442695
        %v1041 = vpow.pop %v1040
        %v1042 = vmul.f32 %v1029, 1.442695
        %v1043 = vpow.pop %v1042
        %v1044 = vmul.f32 %v1030, 1.442695
        %v1045 = vpow.pop %v1044
        %v1046 = vmul.f32 %v1031, 1.442695
        %v1047 = vpow.pop %v1046
        %v1048 = vadd.f32 %v1033, 1.0
        %v1049 = vadd.f32 %v1035, 1.0
        %v1050 = vadd.f32 %v1037, 1.0
        %v1051 = vadd.f32 %v1039, 1.0
        %v1052 = vadd.f32 %v1041, 1.0
        %v1053 = vadd.f32 %v1043, 1.0
        %v1054 = vadd.f32 %v1045, 1.0
        %v1055 = vadd.f32 %v1047, 1.0
        %v1056 = vrcp.pop %v1048
        %v1057 = vrcp.pop %v1049
        %v1058 = vrcp.pop %v1050
        %v1059 = vrcp.pop %v1051
        %v1060 = vrcp.pop %v1052
        %v1061 = vrcp.pop %v1053
        %v1062 = vrcp.pop %v1054
        %v1063 = vrcp.pop %v1055
        %v1064 = vmul.f32 %v1005, %v1056
        %v1065 = vmul.f32 %v1007, %v1057
        %v1066 = vmul.f32 %v1010, %v1058
        %v1067 = vmul.f32 %v1012, %v1059
        %v1068 = vmul.f32 %v1015, %v1060
        %v1069 = vmul.f32 %v1017, %v1061
        %v1070 = vmul.f32 %v1020, %v1062
        %v1071 = vmul.f32 %v1022, %v1063
        %v1072 = vpack.c.bf16 %v1064, %v1064
        %v1073 = vpack.c.bf16 %v1065, %v1065
        %v1074 = vpack.c.bf16 %v1066, %v1066
        %v1075 = vpack.c.bf16 %v1067, %v1067
        %v1076 = vpack.c.bf16 %v1068, %v1068
        %v1077 = vpack.c.bf16 %v1069, %v1069
        %v1078 = vpack.c.bf16 %v1070, %v1070
        %v1079 = vpack.c.bf16 %v1071, %v1071
        %v1088 = vunpack.c.l.b16 %v526
        %v1089 = vunpack.c.l.b16 %v527
        %v1090 = vunpack.c.l.b16 %v528
        %v1091 = vunpack.c.l.b16 %v529
        %v1092 = vunpack.c.l.b16 %v530
        %v1093 = vunpack.c.l.b16 %v531
        %v1094 = vunpack.c.l.b16 %v532
        %v1095 = vunpack.c.l.b16 %v533
        %v1096 = vpack.c.b16 %v1089, %v1088
        %v1097 = vpack.c.b16 %v1091, %v1090
        %v1098 = vpack.c.b16 %v1093, %v1092
        %v1099 = vpack.c.b16 %v1095, %v1094
        %v1101 = vsel %vm631, %v1096, 0
        %v1104 = vsel %vm631, %v1097, 0
        %v1107 = vsel %vm631, %v1098, 0
        %v1110 = vsel %vm631, %v1099, 0
        %1112 = vmatpush.bf16.msra.mxu0 0
        %1113 = vmatpush.bf16.msra.mxu0 0
        %1114 = vmatpush.bf16.msra.mxu0 0
        %1115 = vmatpush.bf16.msra.mxu0 0
        %1116 = vmatpush.bf16.msra.mxu0 0
        %1117 = vmatpush.bf16.msra.mxu0 0
        %1118 = vmatpush.bf16.msra.mxu0 0
        %1119 = vmatpush.bf16.msra.mxu0 %v763
        %1120 = vmatmul.bf16.gmra.mxu0 %v1101
        %v1121 = vpop.f32.mrf.mxu0
        %v1122 = vadd.f32 %v728, %v1121
        %v1123 = vpop.f32.mrf.mxu0
        %v1124 = vadd.f32 %v728, %v1123
        %1125 = vmatmul.bf16.gmra.mxu0 %v1104
        %v1126 = vpop.f32.mrf.mxu0
        %v1127 = vadd.f32 %v728, %v1126
        %v1128 = vpop.f32.mrf.mxu0
        %v1129 = vadd.f32 %v728, %v1128
        %1130 = vmatmul.bf16.gmra.mxu0 %v1107
        %v1131 = vpop.f32.mrf.mxu0
        %v1132 = vadd.f32 %v728, %v1131
        %v1133 = vpop.f32.mrf.mxu0
        %v1134 = vadd.f32 %v728, %v1133
        %1135 = vmatmul.bf16.gmra.mxu0 %v1110
        %v1136 = vpop.f32.mrf.mxu0
        %v1137 = vadd.f32 %v728, %v1136
        %v1138 = vpop.f32.mrf.mxu0
        %v1139 = vadd.f32 %v728, %v1138
        %1140 = vdwg.mxu0
        %v1141 = vsub.f32 0.0, %v1122
        %v1142 = vsub.f32 0.0, %v1124
        %v1143 = vsub.f32 0.0, %v1127
        %v1144 = vsub.f32 0.0, %v1129
        %v1145 = vsub.f32 0.0, %v1132
        %v1146 = vsub.f32 0.0, %v1134
        %v1147 = vsub.f32 0.0, %v1137
        %v1148 = vsub.f32 0.0, %v1139
        %v1149 = vmul.f32 %v1141, 1.442695
        %v1150 = vpow.pop %v1149
        %v1151 = vmul.f32 %v1142, 1.442695
        %v1152 = vpow.pop %v1151
        %v1153 = vmul.f32 %v1143, 1.442695
        %v1154 = vpow.pop %v1153
        %v1155 = vmul.f32 %v1144, 1.442695
        %v1156 = vpow.pop %v1155
        %v1157 = vmul.f32 %v1145, 1.442695
        %v1158 = vpow.pop %v1157
        %v1159 = vmul.f32 %v1146, 1.442695
        %v1160 = vpow.pop %v1159
        %v1161 = vmul.f32 %v1147, 1.442695
        %v1162 = vpow.pop %v1161
        %v1163 = vmul.f32 %v1148, 1.442695
        %v1164 = vpow.pop %v1163
        %v1165 = vadd.f32 %v1150, 1.0
        %v1166 = vadd.f32 %v1152, 1.0
        %v1167 = vadd.f32 %v1154, 1.0
        %v1168 = vadd.f32 %v1156, 1.0
        %v1169 = vadd.f32 %v1158, 1.0
        %v1170 = vadd.f32 %v1160, 1.0
        %v1171 = vadd.f32 %v1162, 1.0
        %v1172 = vadd.f32 %v1164, 1.0
        %v1173 = vrcp.pop %v1165
        %v1174 = vrcp.pop %v1166
        %v1175 = vrcp.pop %v1167
        %v1176 = vrcp.pop %v1168
        %v1177 = vrcp.pop %v1169
        %v1178 = vrcp.pop %v1170
        %v1179 = vrcp.pop %v1171
        %v1180 = vrcp.pop %v1172
        %v1181 = vmul.f32 %v1122, %v1173
        %v1182 = vmul.f32 %v1124, %v1174
        %v1183 = vmul.f32 %v1127, %v1175
        %v1184 = vmul.f32 %v1129, %v1176
        %v1185 = vmul.f32 %v1132, %v1177
        %v1186 = vmul.f32 %v1134, %v1178
        %v1187 = vmul.f32 %v1137, %v1179
        %v1188 = vmul.f32 %v1139, %v1180
        %v1189 = vpack.c.bf16 %v1181, %v1181
        %v1190 = vpack.c.bf16 %v1182, %v1182
        %v1191 = vpack.c.bf16 %v1183, %v1183
        %v1192 = vpack.c.bf16 %v1184, %v1184
        %v1193 = vpack.c.bf16 %v1185, %v1185
        %v1194 = vpack.c.bf16 %v1186, %v1186
        %v1195 = vpack.c.bf16 %v1187, %v1187
        %v1196 = vpack.c.bf16 %v1188, %v1188
        %v1204 = vunpack.c.l.b16 %v1072
        %v1205 = vunpack.c.l.b16 %v1073
        %v1206 = vunpack.c.l.b16 %v1074
        %v1207 = vunpack.c.l.b16 %v1075
        %v1208 = vunpack.c.l.b16 %v1076
        %v1209 = vunpack.c.l.b16 %v1077
        %v1210 = vunpack.c.l.b16 %v1078
        %v1211 = vpack.c.b16 %v1204, %v1204
        %v1212 = vpack.c.b16 %v1206, %v1205
        %v1213 = vpack.c.b16 %v1208, %v1207
        %v1214 = vpack.c.b16 %v1210, %v1209
        %v1217 = vsel %vm644, 0, %v1211
        %v1225 = vunpack.c.l.b16 %v1189
        %v1226 = vunpack.c.l.b16 %v1190
        %v1227 = vunpack.c.l.b16 %v1191
        %v1228 = vunpack.c.l.b16 %v1192
        %v1229 = vunpack.c.l.b16 %v1193
        %v1230 = vunpack.c.l.b16 %v1194
        %v1231 = vunpack.c.l.b16 %v1195
        %v1232 = vpack.c.b16 %v1225, %v1225
        %v1233 = vpack.c.b16 %v1227, %v1226
        %v1234 = vpack.c.b16 %v1229, %v1228
        %v1235 = vpack.c.b16 %v1231, %v1230
        %v1237 = vsel %vm644, 0, %v1232
        %v1238 = vlaneseq
        %v1239 = vshrl.u32 %v1238, 7
        %v1240 = vadd.s32 %v1239, 8
        %v1241 = vadd.s32 %v1239, 16
        %v1242 = vadd.s32 %v1239, 24
        %v1243 = vadd.s32 %v1239, 32
        %v1244 = vadd.s32 %v1239, 40
        %v1245 = vadd.s32 %v1239, 48
        %v1246 = vadd.s32 %v1239, 56
        %vm1247 = vcmp.lt.s32.totalorder %v1239, 0
        %v1248 = vsub.s32 0, %v1239
        %v1249 = vsel %vm1247, %v1248, %v1239
        %v1250 = vshrl.u32 %v1249, 3
        %v1251 = vand.u32 %v1249, 7
        %v1252 = vsub.s32 0, %v1251
        %v1253 = vsel %vm1247, %v1252, %v1251
        %vm1254 = vcmp.lt.s32.totalorder %v1240, 0
        %v1255 = vsub.s32 0, %v1240
        %v1256 = vsel %vm1254, %v1255, %v1240
        %v1257 = vshrl.u32 %v1256, 3
        %v1258 = vand.u32 %v1256, 7
        %v1259 = vsub.s32 0, %v1258
        %v1260 = vsel %vm1254, %v1259, %v1258
        %vm1261 = vcmp.lt.s32.totalorder %v1241, 0
        %v1262 = vsub.s32 0, %v1241
        %v1263 = vsel %vm1261, %v1262, %v1241
        %v1264 = vshrl.u32 %v1263, 3
        %v1265 = vand.u32 %v1263, 7
        %v1266 = vsub.s32 0, %v1265
        %v1267 = vsel %vm1261, %v1266, %v1265
        %vm1268 = vcmp.lt.s32.totalorder %v1242, 0
        %v1269 = vsub.s32 0, %v1242
        %v1270 = vsel %vm1268, %v1269, %v1242
        %v1271 = vshrl.u32 %v1270, 3
        %v1272 = vand.u32 %v1270, 7
        %v1273 = vsub.s32 0, %v1272
        %v1274 = vsel %vm1268, %v1273, %v1272
        %vm1275 = vcmp.lt.s32.totalorder %v1243, 0
        %v1276 = vsub.s32 0, %v1243
        %v1277 = vsel %vm1275, %v1276, %v1243
        %v1278 = vshrl.u32 %v1277, 3
        %v1279 = vand.u32 %v1277, 7
        %v1280 = vsub.s32 0, %v1279
        %v1281 = vsel %vm1275, %v1280, %v1279
        %vm1282 = vcmp.lt.s32.totalorder %v1244, 0
        %v1283 = vsub.s32 0, %v1244
        %v1284 = vsel %vm1282, %v1283, %v1244
        %v1285 = vshrl.u32 %v1284, 3
        %v1286 = vand.u32 %v1284, 7
        %v1287 = vsub.s32 0, %v1286
        %v1288 = vsel %vm1282, %v1287, %v1286
        %vm1289 = vcmp.lt.s32.totalorder %v1245, 0
        %v1290 = vsub.s32 0, %v1245
        %v1291 = vsel %vm1289, %v1290, %v1245
        %v1292 = vshrl.u32 %v1291, 3
        %v1293 = vand.u32 %v1291, 7
        %v1294 = vsub.s32 0, %v1293
        %v1295 = vsel %vm1289, %v1294, %v1293
        %vm1296 = vcmp.lt.s32.totalorder %v1246, 0
        %v1297 = vsub.s32 0, %v1246
        %v1298 = vsel %vm1296, %v1297, %v1246
        %v1299 = vshrl.u32 %v1298, 3
        %v1300 = vand.u32 %v1298, 7
        %v1301 = vsub.s32 0, %v1300
        %v1302 = vsel %vm1296, %v1301, %v1300
        %vm1303 = vcmp.ne.s32.totalorder %v1253, 0
        %vm1304 = vcmp.ne.s32.totalorder %v1260, 0
        %vm1305 = vcmp.ne.s32.totalorder %v1267, 0
        %vm1306 = vcmp.ne.s32.totalorder %v1274, 0
        %vm1307 = vcmp.ne.s32.totalorder %v1281, 0
        %vm1308 = vcmp.ne.s32.totalorder %v1288, 0
        %vm1309 = vcmp.ne.s32.totalorder %v1295, 0
        %vm1310 = vcmp.ne.s32.totalorder %v1302, 0
        %vm1311 = vcmp.lt.s32.totalorder %v1253, 0
        %vm1312 = vcmp.lt.s32.totalorder %v1260, 0
        %vm1313 = vcmp.lt.s32.totalorder %v1267, 0
        %vm1314 = vcmp.lt.s32.totalorder %v1274, 0
        %vm1315 = vcmp.lt.s32.totalorder %v1281, 0
        %vm1316 = vcmp.lt.s32.totalorder %v1288, 0
        %vm1317 = vcmp.lt.s32.totalorder %v1295, 0
        %vm1318 = vcmp.lt.s32.totalorder %v1302, 0
        %vm1319 = vmand %vm1311, %vm1303
        %vm1320 = vmand %vm1312, %vm1304
        %vm1321 = vmand %vm1313, %vm1305
        %vm1322 = vmand %vm1314, %vm1306
        %vm1323 = vmand %vm1315, %vm1307
        %vm1324 = vmand %vm1316, %vm1308
        %vm1325 = vmand %vm1317, %vm1309
        %vm1326 = vmand %vm1318, %vm1310
        %v1327 = vadd.s32 %v1253, 8
        %v1328 = vadd.s32 %v1260, 8
        %v1329 = vadd.s32 %v1267, 8
        %v1330 = vadd.s32 %v1274, 8
        %v1331 = vadd.s32 %v1281, 8
        %v1332 = vadd.s32 %v1288, 8
        %v1333 = vadd.s32 %v1295, 8
        %v1334 = vadd.s32 %v1302, 8
        %v1335 = vsel %vm1319, %v1327, %v1253
        %v1336 = vsel %vm1320, %v1328, %v1260
        %v1337 = vsel %vm1321, %v1329, %v1267
        %v1338 = vsel %vm1322, %v1330, %v1274
        %v1339 = vsel %vm1323, %v1331, %v1281
        %v1340 = vsel %vm1324, %v1332, %v1288
        %v1341 = vsel %vm1325, %v1333, %v1295
        %v1342 = vsel %vm1326, %v1334, %v1302
        %vm1343 = vcmp.eq.s32.totalorder %v1335, 0
        %vm1344 = vcmp.eq.s32.totalorder %v1336, 0
        %vm1345 = vcmp.eq.s32.totalorder %v1337, 0
        %vm1346 = vcmp.eq.s32.totalorder %v1338, 0
        %vm1347 = vcmp.eq.s32.totalorder %v1339, 0
        %vm1348 = vcmp.eq.s32.totalorder %v1340, 0
        %vm1349 = vcmp.eq.s32.totalorder %v1341, 0
        %vm1350 = vcmp.eq.s32.totalorder %v1342, 0
        %vm1351 = vsmask.f32 256
        %v1352 = vshrl.u32 %v1237, 16
        %v1354 = vrot.slane %v1352, 7
        %v1355 = vshll.u32 %v1237, 16
        %v1357 = vor.u32 %v1354, %v1355
        %v1359 = vshrl.u32 %v1233, 16
        %v1361 = vrot.slane %v1359, 7
        %v1362 = vshll.u32 %v1233, 16
        %v1364 = vor.u32 %v1361, %v1362
        %v1365 = vsel %vm1351, %v1354, %v1364
        %v1367 = vshrl.u32 %v1234, 16
        %v1369 = vrot.slane %v1367, 7
        %v1370 = vshll.u32 %v1234, 16
        %v1372 = vor.u32 %v1369, %v1370
        %v1373 = vsel %vm1351, %v1361, %v1372
        %v1375 = vshrl.u32 %v1235, 16
        %v1377 = vrot.slane %v1375, 7
        %v1378 = vshll.u32 %v1235, 16
        %v1380 = vor.u32 %v1377, %v1378
        %v1381 = vsel %vm1351, %v1369, %v1380
        %vm1386 = vcmask 1040384
        %vm1387 = vmand %vm1386, %vm1351
        %v1388 = vsel %vm1387, 0, %v1357
        %v1389 = vsel %vm1343, 1, 0
        %v1390 = vsel %vm1344, 1, 0
        %v1391 = vsel %vm1345, 1, 0
        %v1392 = vsel %vm1346, 1, 0
        %v1393 = vsel %vm1347, 1, 0
        %v1394 = vsel %vm1348, 1, 0
        %v1395 = vsel %vm1349, 1, 0
        %v1396 = vsel %vm1350, 1, 0
        %vm1397 = vcmp.eq.s32.totalorder %v1389, 1
        %vm1398 = vcmp.eq.s32.totalorder %v1390, 1
        %vm1399 = vcmp.eq.s32.totalorder %v1391, 1
        %vm1400 = vcmp.eq.s32.totalorder %v1392, 1
        %vm1401 = vcmp.eq.s32.totalorder %v1393, 1
        %vm1402 = vcmp.eq.s32.totalorder %v1394, 1
        %vm1403 = vcmp.eq.s32.totalorder %v1395, 1
        %vm1404 = vcmp.eq.s32.totalorder %v1396, 1
        %vm1405 = vmpackc.low %vm1397, %vm1397
        %vm1406 = vmpackc.low %vm1398, %vm1398
        %vm1407 = vmpackc.low %vm1399, %vm1399
        %vm1408 = vmpackc.low %vm1400, %vm1400
        %vm1409 = vmpackc.low %vm1401, %vm1401
        %vm1410 = vmpackc.low %vm1402, %vm1402
        %vm1411 = vmpackc.low %vm1403, %vm1403
        %vm1412 = vmpackc.low %vm1404, %vm1404
        %v1413 = vsel %vm1405, 65537, 0
        %v1414 = vsel %vm1406, 65537, 0
        %v1415 = vsel %vm1407, 65537, 0
        %v1416 = vsel %vm1408, 65537, 0
        %v1417 = vsel %vm1409, 65537, 0
        %v1418 = vsel %vm1410, 65537, 0
        %v1419 = vsel %vm1411, 65537, 0
        %v1420 = vsel %vm1412, 65537, 0
        %v1421 = vunpack.c.l.b16 %v1413
        %v1422 = vunpack.c.l.b16 %v1414
        %v1423 = vunpack.c.l.b16 %v1415
        %v1424 = vunpack.c.l.b16 %v1416
        %v1425 = vunpack.c.l.b16 %v1417
        %v1426 = vunpack.c.l.b16 %v1418
        %v1427 = vunpack.c.l.b16 %v1419
        %v1428 = vunpack.c.l.b16 %v1420
        %v1429 = vpack.c.b16 %v1422, %v1421
        %v1430 = vpack.c.b16 %v1424, %v1423
        %v1431 = vpack.c.b16 %v1426, %v1425
        %v1432 = vpack.c.b16 %v1428, %v1427
        %v1433 = vunpack.c.l.b16 %v1429
        %v1434 = vunpack.c.h.b16 %v1429
        %v1435 = vunpack.c.l.b16 0
        %v1436 = vunpack.c.h.b16 0
        %vm1437 = vcmp.ne.s32.totalorder %v1433, %v1435
        %vm1438 = vcmp.ne.s32.totalorder %v1434, %v1436
        %vm1439 = vmpackc.low %vm1438, %vm1437
        %v1440 = vunpack.c.l.b16 %v1430
        %v1441 = vunpack.c.h.b16 %v1430
        %v1442 = vunpack.c.l.b16 0
        %v1443 = vunpack.c.h.b16 0
        %vm1444 = vcmp.ne.s32.totalorder %v1440, %v1442
        %vm1445 = vcmp.ne.s32.totalorder %v1441, %v1443
        %vm1446 = vmpackc.low %vm1445, %vm1444
        %v1447 = vunpack.c.l.b16 %v1431
        %v1448 = vunpack.c.h.b16 %v1431
        %v1449 = vunpack.c.l.b16 0
        %v1450 = vunpack.c.h.b16 0
        %vm1451 = vcmp.ne.s32.totalorder %v1447, %v1449
        %vm1452 = vcmp.ne.s32.totalorder %v1448, %v1450
        %vm1453 = vmpackc.low %vm1452, %vm1451
        %v1454 = vunpack.c.l.b16 %v1432
        %v1455 = vunpack.c.h.b16 %v1432
        %v1456 = vunpack.c.l.b16 0
        %v1457 = vunpack.c.h.b16 0
        %vm1458 = vcmp.ne.s32.totalorder %v1454, %v1456
        %vm1459 = vcmp.ne.s32.totalorder %v1455, %v1457
        %vm1460 = vmpackc.low %vm1459, %vm1458
        %v1461 = vsel %vm1439, 0, %v1388
        %v1462 = vsel %vm1446, 0, %v1365
        %v1463 = vsel %vm1453, 0, %v1373
        %v1464 = vsel %vm1460, 0, %v1381
        %v1473 = vunpack.c.l.b16 %v955
        %v1474 = vunpack.c.l.b16 %v956
        %v1475 = vunpack.c.l.b16 %v957
        %v1476 = vunpack.c.l.b16 %v958
        %v1477 = vunpack.c.l.b16 %v959
        %v1478 = vunpack.c.l.b16 %v960
        %v1479 = vunpack.c.l.b16 %v961
        %v1480 = vunpack.c.l.b16 %v962
        %v1481 = vpack.c.b16 %v1474, %v1473
        %v1482 = vpack.c.b16 %v1476, %v1475
        %v1483 = vpack.c.b16 %v1478, %v1477
        %v1484 = vpack.c.b16 %v1480, %v1479
        %v1486 = vshrl.u32 %v1481, 16
        %v1488 = vrot.slane %v1486, 7
        %v1489 = vshll.u32 %v1481, 16
        %v1491 = vor.u32 %v1488, %v1489
        %v1493 = vshrl.u32 %v1482, 16
        %v1495 = vrot.slane %v1493, 7
        %v1496 = vshll.u32 %v1482, 16
        %v1498 = vor.u32 %v1495, %v1496
        %v1499 = vsel %vm1351, %v1488, %v1498
        %v1501 = vshrl.u32 %v1483, 16
        %v1503 = vrot.slane %v1501, 7
        %v1504 = vshll.u32 %v1483, 16
        %v1506 = vor.u32 %v1503, %v1504
        %v1507 = vsel %vm1351, %v1495, %v1506
        %v1509 = vshrl.u32 %v1484, 16
        %v1511 = vrot.slane %v1509, 7
        %v1512 = vshll.u32 %v1484, 16
        %v1514 = vor.u32 %v1511, %v1512
        %v1515 = vsel %vm1351, %v1503, %v1514
        %v1520 = vsel %vm1387, 0, %v1491
        %v1521 = vsel %vm1439, 0, %v1520
        %v1522 = vsel %vm1446, 0, %v1499
        %v1523 = vsel %vm1453, 0, %v1507
        %v1524 = vsel %vm1460, 0, %v1515
        %v1526 = vunpack.c.l.b16 %v1196
        %v1527 = vpack.c.b16 %v1226, %v1225
        %v1528 = vpack.c.b16 %v1228, %v1227
        %v1529 = vpack.c.b16 %v1230, %v1229
        %v1530 = vpack.c.b16 %v1526, %v1231
        %v1532 = vshrl.u32 %v1527, 16
        %v1534 = vrot.slane %v1532, 7
        %v1535 = vshll.u32 %v1527, 16
        %v1537 = vor.u32 %v1534, %v1535
        %v1539 = vshrl.u32 %v1528, 16
        %v1541 = vrot.slane %v1539, 7
        %v1542 = vshll.u32 %v1528, 16
        %v1544 = vor.u32 %v1541, %v1542
        %v1545 = vsel %vm1351, %v1534, %v1544
        %v1547 = vshrl.u32 %v1529, 16
        %v1549 = vrot.slane %v1547, 7
        %v1550 = vshll.u32 %v1529, 16
        %v1552 = vor.u32 %v1549, %v1550
        %v1553 = vsel %vm1351, %v1541, %v1552
        %v1555 = vshrl.u32 %v1530, 16
        %v1557 = vrot.slane %v1555, 7
        %v1558 = vshll.u32 %v1530, 16
        %v1560 = vor.u32 %v1557, %v1558
        %v1561 = vsel %vm1351, %v1549, %v1560
        %v1566 = vsel %vm1387, 0, %v1537
        %v1567 = vsel %vm1439, 0, %v1566
        %v1568 = vsel %vm1446, 0, %v1545
        %v1569 = vsel %vm1453, 0, %v1553
        %v1570 = vsel %vm1460, 0, %v1561
        %v1571 = vld [vmem:[%s6] sm:$0x3]
        %s1572 = scalar_lea.vmem %s6, 2
        %v1573 = vld [vmem:[%s1572] sm:$0x3]
        %vm1574 = vcmask 31744
        %v1575 = vsel %vm1574, %v1217, 0
        %v1578 = vsel %vm1574, %v1212, 0
        %v1581 = vsel %vm1574, %v1213, 0
        %v1584 = vsel %vm1574, %v1214, 0
        %vm1586 = vcmask 1041408
        %v1588 = vsel %vm1586, %v1573, 0
        %1590 = vmatpush.bf16.msra.mxu0 0
        %1591 = vmatpush.bf16.msra.mxu0 0
        %1592 = vmatpush.bf16.msra.mxu0 0
        %1593 = vmatpush.bf16.msra.mxu0 0
        %1594 = vmatpush.bf16.msra.mxu0 0
        %1595 = vmatpush.bf16.msra.mxu0 0
        %1596 = vmatpush.bf16.msra.mxu0 0
        %1597 = vmatpush.bf16.msra.mxu0 %v1588
        %1598 = vmatmul.bf16.gmra.mxu0 %v1575
        %v1599 = vpop.f32.mrf.mxu0
        %v1600 = vadd.f32 0.0, %v1599
        %v1601 = vpop.f32.mrf.mxu0
        %v1602 = vadd.f32 0.0, %v1601
        %1603 = vmatmul.bf16.gmra.mxu0 %v1578
        %v1604 = vpop.f32.mrf.mxu0
        %v1605 = vadd.f32 0.0, %v1604
        %v1606 = vpop.f32.mrf.mxu0
        %v1607 = vadd.f32 0.0, %v1606
        %1608 = vmatmul.bf16.gmra.mxu0 %v1581
        %v1609 = vpop.f32.mrf.mxu0
        %v1610 = vadd.f32 0.0, %v1609
        %v1611 = vpop.f32.mrf.mxu0
        %v1612 = vadd.f32 0.0, %v1611
        %1613 = vmatmul.bf16.gmra.mxu0 %v1584
        %v1614 = vpop.f32.mrf.mxu0
        %v1615 = vadd.f32 0.0, %v1614
        %v1616 = vpop.f32.mrf.mxu0
        %v1617 = vadd.f32 0.0, %v1616
        %1618 = vdwg.mxu0
        %v1620 = vsel %vm1574, %v1461, 0
        %v1623 = vsel %vm1574, %v1462, 0
        %v1626 = vsel %vm1574, %v1463, 0
        %v1629 = vsel %vm1574, %v1464, 0
        %v1632 = vsel %vm1586, %v1571, 0
        %1634 = vmatpush.bf16.msra.mxu0 0
        %1635 = vmatpush.bf16.msra.mxu0 0
        %1636 = vmatpush.bf16.msra.mxu0 0
        %1637 = vmatpush.bf16.msra.mxu0 0
        %1638 = vmatpush.bf16.msra.mxu0 0
        %1639 = vmatpush.bf16.msra.mxu0 0
        %1640 = vmatpush.bf16.msra.mxu0 0
        %1641 = vmatpush.bf16.msra.mxu0 %v1632
        %1642 = vmatmul.bf16.gmra.mxu0 %v1620
        %v1643 = vpop.f32.mrf.mxu0
        %v1644 = vadd.f32 %v1600, %v1643
        %v1645 = vpop.f32.mrf.mxu0
        %v1646 = vadd.f32 %v1602, %v1645
        %1647 = vmatmul.bf16.gmra.mxu0 %v1623
        %v1648 = vpop.f32.mrf.mxu0
        %v1649 = vadd.f32 %v1605, %v1648
        %v1650 = vpop.f32.mrf.mxu0
        %v1651 = vadd.f32 %v1607, %v1650
        %1652 = vmatmul.bf16.gmra.mxu0 %v1626
        %v1653 = vpop.f32.mrf.mxu0
        %v1654 = vadd.f32 %v1610, %v1653
        %v1655 = vpop.f32.mrf.mxu0
        %v1656 = vadd.f32 %v1612, %v1655
        %1657 = vmatmul.bf16.gmra.mxu0 %v1629
        %v1658 = vpop.f32.mrf.mxu0
        %v1659 = vadd.f32 %v1615, %v1658
        %v1660 = vpop.f32.mrf.mxu0
        %v1661 = vadd.f32 %v1617, %v1660
        %1662 = vdwg.mxu0
        %s1663 = scalar_lea.vmem %s6, 4
        %v1664 = vld [vmem:[%s1663] sm:$0x3]
        %v1665 = vsel %vm1574, %v1237, 0
        %v1667 = vsel %vm1574, %v1233, 0
        %v1669 = vsel %vm1574, %v1234, 0
        %v1671 = vsel %vm1574, %v1235, 0
        %v1674 = vsel %vm1586, %v1664, 0
        %1676 = vmatpush.bf16.msra.mxu0 0
        %1677 = vmatpush.bf16.msra.mxu0 0
        %1678 = vmatpush.bf16.msra.mxu0 0
        %1679 = vmatpush.bf16.msra.mxu0 0
        %1680 = vmatpush.bf16.msra.mxu0 0
        %1681 = vmatpush.bf16.msra.mxu0 0
        %1682 = vmatpush.bf16.msra.mxu0 0
        %1683 = vmatpush.bf16.msra.mxu0 %v1674
        %1684 = vmatmul.bf16.gmra.mxu0 %v1665
        %v1685 = vpop.f32.mrf.mxu0
        %v1686 = vadd.f32 0.0, %v1685
        %v1687 = vpop.f32.mrf.mxu0
        %v1688 = vadd.f32 0.0, %v1687
        %1689 = vmatmul.bf16.gmra.mxu0 %v1667
        %v1690 = vpop.f32.mrf.mxu0
        %v1691 = vadd.f32 0.0, %v1690
        %v1692 = vpop.f32.mrf.mxu0
        %v1693 = vadd.f32 0.0, %v1692
        %1694 = vmatmul.bf16.gmra.mxu0 %v1669
        %v1695 = vpop.f32.mrf.mxu0
        %v1696 = vadd.f32 0.0, %v1695
        %v1697 = vpop.f32.mrf.mxu0
        %v1698 = vadd.f32 0.0, %v1697
        %1699 = vmatmul.bf16.gmra.mxu0 %v1671
        %v1700 = vpop.f32.mrf.mxu0
        %v1701 = vadd.f32 0.0, %v1700
        %v1702 = vpop.f32.mrf.mxu0
        %v1703 = vadd.f32 0.0, %v1702
        %1704 = vdwg.mxu0
        %v1705 = vadd.f32 %v1644, %v1686
        %v1706 = vadd.f32 %v1646, %v1688
        %v1707 = vadd.f32 %v1649, %v1691
        %v1708 = vadd.f32 %v1651, %v1693
        %v1709 = vadd.f32 %v1654, %v1696
        %v1710 = vadd.f32 %v1656, %v1698
        %v1711 = vadd.f32 %v1659, %v1701
        %v1712 = vadd.f32 %v1661, %v1703
        %s1713 = scalar_lea.vmem %s6, 6
        %v1714 = vld [vmem:[%s1713] sm:$0x3]
        %v1716 = vsel %vm1574, %v1521, 0
        %v1719 = vsel %vm1574, %v1522, 0
        %v1722 = vsel %vm1574, %v1523, 0
        %v1725 = vsel %vm1574, %v1524, 0
        %v1728 = vsel %vm1586, %v1714, 0
        %1730 = vmatpush.bf16.msra.mxu0 0
        %1731 = vmatpush.bf16.msra.mxu0 0
        %1732 = vmatpush.bf16.msra.mxu0 0
        %1733 = vmatpush.bf16.msra.mxu0 0
        %1734 = vmatpush.bf16.msra.mxu0 0
        %1735 = vmatpush.bf16.msra.mxu0 0
        %1736 = vmatpush.bf16.msra.mxu0 0
        %1737 = vmatpush.bf16.msra.mxu0 %v1728
        %1738 = vmatmul.bf16.gmra.mxu0 %v1716
        %v1739 = vpop.f32.mrf.mxu0
        %v1740 = vadd.f32 0.0, %v1739
        %v1741 = vpop.f32.mrf.mxu0
        %v1742 = vadd.f32 0.0, %v1741
        %1743 = vmatmul.bf16.gmra.mxu0 %v1719
        %v1744 = vpop.f32.mrf.mxu0
        %v1745 = vadd.f32 0.0, %v1744
        %v1746 = vpop.f32.mrf.mxu0
        %v1747 = vadd.f32 0.0, %v1746
        %1748 = vmatmul.bf16.gmra.mxu0 %v1722
        %v1749 = vpop.f32.mrf.mxu0
        %v1750 = vadd.f32 0.0, %v1749
        %v1751 = vpop.f32.mrf.mxu0
        %v1752 = vadd.f32 0.0, %v1751
        %1753 = vmatmul.bf16.gmra.mxu0 %v1725
        %v1754 = vpop.f32.mrf.mxu0
        %v1755 = vadd.f32 0.0, %v1754
        %v1756 = vpop.f32.mrf.mxu0
        %v1757 = vadd.f32 0.0, %v1756
        %1758 = vdwg.mxu0
        %v1759 = vadd.f32 %v1705, %v1740
        %v1760 = vadd.f32 %v1706, %v1742
        %v1761 = vadd.f32 %v1707, %v1745
        %v1762 = vadd.f32 %v1708, %v1747
        %v1763 = vadd.f32 %v1709, %v1750
        %v1764 = vadd.f32 %v1710, %v1752
        %v1765 = vadd.f32 %v1711, %v1755
        %v1766 = vadd.f32 %v1712, %v1757
        %s1767 = scalar_lea.vmem %s6, 8
        %v1768 = vld [vmem:[%s1767] sm:$0x3]
        %v1770 = vsel %vm1574, %v842, 0
        %v1773 = vsel %vm1574, %v843, 0
        %v1776 = vsel %vm1574, %v844, 0
        %v1779 = vsel %vm1574, %v845, 0
        %v1782 = vsel %vm1586, %v1768, 0
        %1784 = vmatpush.bf16.msra.mxu0 0
        %1785 = vmatpush.bf16.msra.mxu0 0
        %1786 = vmatpush.bf16.msra.mxu0 0
        %1787 = vmatpush.bf16.msra.mxu0 0
        %1788 = vmatpush.bf16.msra.mxu0 0
        %1789 = vmatpush.bf16.msra.mxu0 0
        %1790 = vmatpush.bf16.msra.mxu0 0
        %1791 = vmatpush.bf16.msra.mxu0 %v1782
        %1792 = vmatmul.bf16.gmra.mxu0 %v1770
        %v1793 = vpop.f32.mrf.mxu0
        %v1794 = vadd.f32 0.0, %v1793
        %v1795 = vpop.f32.mrf.mxu0
        %v1796 = vadd.f32 0.0, %v1795
        %1797 = vmatmul.bf16.gmra.mxu0 %v1773
        %v1798 = vpop.f32.mrf.mxu0
        %v1799 = vadd.f32 0.0, %v1798
        %v1800 = vpop.f32.mrf.mxu0
        %v1801 = vadd.f32 0.0, %v1800
        %1802 = vmatmul.bf16.gmra.mxu0 %v1776
        %v1803 = vpop.f32.mrf.mxu0
        %v1804 = vadd.f32 0.0, %v1803
        %v1805 = vpop.f32.mrf.mxu0
        %v1806 = vadd.f32 0.0, %v1805
        %1807 = vmatmul.bf16.gmra.mxu0 %v1779
        %v1808 = vpop.f32.mrf.mxu0
        %v1809 = vadd.f32 0.0, %v1808
        %v1810 = vpop.f32.mrf.mxu0
        %v1811 = vadd.f32 0.0, %v1810
        %1812 = vdwg.mxu0
        %v1813 = vadd.f32 %v1759, %v1794
        %v1814 = vadd.f32 %v1760, %v1796
        %v1815 = vadd.f32 %v1761, %v1799
        %v1816 = vadd.f32 %v1762, %v1801
        %v1817 = vadd.f32 %v1763, %v1804
        %v1818 = vadd.f32 %v1764, %v1806
        %v1819 = vadd.f32 %v1765, %v1809
        %v1820 = vadd.f32 %v1766, %v1811
        %s1821 = scalar_lea.vmem %s6, 10
        %v1822 = vld [vmem:[%s1821] sm:$0x3]
        %v1823 = vsel %vm1574, %v1481, 0
        %v1825 = vsel %vm1574, %v1482, 0
        %v1827 = vsel %vm1574, %v1483, 0
        %v1829 = vsel %vm1574, %v1484, 0
        %v1832 = vsel %vm1586, %v1822, 0
        %1834 = vmatpush.bf16.msra.mxu0 0
        %1835 = vmatpush.bf16.msra.mxu0 0
        %1836 = vmatpush.bf16.msra.mxu0 0
        %1837 = vmatpush.bf16.msra.mxu0 0
        %1838 = vmatpush.bf16.msra.mxu0 0
        %1839 = vmatpush.bf16.msra.mxu0 0
        %1840 = vmatpush.bf16.msra.mxu0 0
        %1841 = vmatpush.bf16.msra.mxu0 %v1832
        %1842 = vmatmul.bf16.gmra.mxu0 %v1823
        %v1843 = vpop.f32.mrf.mxu0
        %v1844 = vadd.f32 0.0, %v1843
        %v1845 = vpop.f32.mrf.mxu0
        %v1846 = vadd.f32 0.0, %v1845
        %1847 = vmatmul.bf16.gmra.mxu0 %v1825
        %v1848 = vpop.f32.mrf.mxu0
        %v1849 = vadd.f32 0.0, %v1848
        %v1850 = vpop.f32.mrf.mxu0
        %v1851 = vadd.f32 0.0, %v1850
        %1852 = vmatmul.bf16.gmra.mxu0 %v1827
        %v1853 = vpop.f32.mrf.mxu0
        %v1854 = vadd.f32 0.0, %v1853
        %v1855 = vpop.f32.mrf.mxu0
        %v1856 = vadd.f32 0.0, %v1855
        %1857 = vmatmul.bf16.gmra.mxu0 %v1829
        %v1858 = vpop.f32.mrf.mxu0
        %v1859 = vadd.f32 0.0, %v1858
        %v1860 = vpop.f32.mrf.mxu0
        %v1861 = vadd.f32 0.0, %v1860
        %1862 = vdwg.mxu0
        %v1863 = vadd.f32 %v1813, %v1844
        %v1864 = vadd.f32 %v1814, %v1846
        %v1865 = vadd.f32 %v1815, %v1849
        %v1866 = vadd.f32 %v1816, %v1851
        %v1867 = vadd.f32 %v1817, %v1854
        %v1868 = vadd.f32 %v1818, %v1856
        %v1869 = vadd.f32 %v1819, %v1859
        %v1870 = vadd.f32 %v1820, %v1861
        %s1871 = scalar_lea.vmem %s6, 12
        %v1872 = vld [vmem:[%s1871] sm:$0x3]
        %v1874 = vsel %vm1574, %v1567, 0
        %v1877 = vsel %vm1574, %v1568, 0
        %v1880 = vsel %vm1574, %v1569, 0
        %v1883 = vsel %vm1574, %v1570, 0
        %v1886 = vsel %vm1586, %v1872, 0
        %1888 = vmatpush.bf16.msra.mxu0 0
        %1889 = vmatpush.bf16.msra.mxu0 0
        %1890 = vmatpush.bf16.msra.mxu0 0
        %1891 = vmatpush.bf16.msra.mxu0 0
        %1892 = vmatpush.bf16.msra.mxu0 0
        %1893 = vmatpush.bf16.msra.mxu0 0
        %1894 = vmatpush.bf16.msra.mxu0 0
        %1895 = vmatpush.bf16.msra.mxu0 %v1886
        %1896 = vmatmul.bf16.gmra.mxu0 %v1874
        %v1897 = vpop.f32.mrf.mxu0
        %v1898 = vadd.f32 0.0, %v1897
        %v1899 = vpop.f32.mrf.mxu0
        %v1900 = vadd.f32 0.0, %v1899
        %1901 = vmatmul.bf16.gmra.mxu0 %v1877
        %v1902 = vpop.f32.mrf.mxu0
        %v1903 = vadd.f32 0.0, %v1902
        %v1904 = vpop.f32.mrf.mxu0
        %v1905 = vadd.f32 0.0, %v1904
        %1906 = vmatmul.bf16.gmra.mxu0 %v1880
        %v1907 = vpop.f32.mrf.mxu0
        %v1908 = vadd.f32 0.0, %v1907
        %v1909 = vpop.f32.mrf.mxu0
        %v1910 = vadd.f32 0.0, %v1909
        %1911 = vmatmul.bf16.gmra.mxu0 %v1883
        %v1912 = vpop.f32.mrf.mxu0
        %v1913 = vadd.f32 0.0, %v1912
        %v1914 = vpop.f32.mrf.mxu0
        %v1915 = vadd.f32 0.0, %v1914
        %1916 = vdwg.mxu0
        %v1917 = vadd.f32 %v1863, %v1898
        %v1918 = vadd.f32 %v1864, %v1900
        %v1919 = vadd.f32 %v1865, %v1903
        %v1920 = vadd.f32 %v1866, %v1905
        %v1921 = vadd.f32 %v1867, %v1908
        %v1922 = vadd.f32 %v1868, %v1910
        %v1923 = vadd.f32 %v1869, %v1913
        %v1924 = vadd.f32 %v1870, %v1915
        %s1925 = scalar_lea.vmem %s6, 14
        %v1926 = vld [vmem:[%s1925] sm:$0x3]
        %v1928 = vunpack.c.l.b16 %v1079
        %v1929 = vpack.c.b16 %v1205, %v1204
        %v1930 = vpack.c.b16 %v1207, %v1206
        %v1931 = vpack.c.b16 %v1209, %v1208
        %v1932 = vpack.c.b16 %v1928, %v1210
        %v1934 = vsel %vm1574, %v1929, 0
        %v1937 = vsel %vm1574, %v1930, 0
        %v1940 = vsel %vm1574, %v1931, 0
        %v1943 = vsel %vm1574, %v1932, 0
        %v1946 = vsel %vm1586, %v1926, 0
        %1948 = vmatpush.bf16.msra.mxu0 0
        %1949 = vmatpush.bf16.msra.mxu0 0
        %1950 = vmatpush.bf16.msra.mxu0 0
        %1951 = vmatpush.bf16.msra.mxu0 0
        %1952 = vmatpush.bf16.msra.mxu0 0
        %1953 = vmatpush.bf16.msra.mxu0 0
        %1954 = vmatpush.bf16.msra.mxu0 0
        %1955 = vmatpush.bf16.msra.mxu0 %v1946
        %1956 = vmatmul.bf16.gmra.mxu0 %v1934
        %v1957 = vpop.f32.mrf.mxu0
        %v1958 = vadd.f32 0.0, %v1957
        %v1959 = vpop.f32.mrf.mxu0
        %v1960 = vadd.f32 0.0, %v1959
        %1961 = vmatmul.bf16.gmra.mxu0 %v1937
        %v1962 = vpop.f32.mrf.mxu0
        %v1963 = vadd.f32 0.0, %v1962
        %v1964 = vpop.f32.mrf.mxu0
        %v1965 = vadd.f32 0.0, %v1964
        %1966 = vmatmul.bf16.gmra.mxu0 %v1940
        %v1967 = vpop.f32.mrf.mxu0
        %v1968 = vadd.f32 0.0, %v1967
        %v1969 = vpop.f32.mrf.mxu0
        %v1970 = vadd.f32 0.0, %v1969
        %1971 = vmatmul.bf16.gmra.mxu0 %v1943
        %v1972 = vpop.f32.mrf.mxu0
        %v1973 = vadd.f32 0.0, %v1972
        %v1974 = vpop.f32.mrf.mxu0
        %v1975 = vadd.f32 0.0, %v1974
        %1976 = vdwg.mxu0
        %v1977 = vadd.f32 %v1917, %v1958
        %v1978 = vadd.f32 %v1918, %v1960
        %v1979 = vadd.f32 %v1919, %v1963
        %v1980 = vadd.f32 %v1920, %v1965
        %v1981 = vadd.f32 %v1921, %v1968
        %v1982 = vadd.f32 %v1922, %v1970
        %v1983 = vadd.f32 %v1923, %v1973
        %v1984 = vadd.f32 %v1924, %v1975
        %s1985 = scalar_lea.vmem %s6, 16
        %v1986 = vld [vmem:[%s1985] sm:$0x3]
        %v1987 = vsel %vm1574, %v1527, 0
        %v1989 = vsel %vm1574, %v1528, 0
        %v1991 = vsel %vm1574, %v1529, 0
        %v1993 = vsel %vm1574, %v1530, 0
        %v1996 = vsel %vm1586, %v1986, 0
        %1998 = vmatpush.bf16.msra.mxu0 0
        %1999 = vmatpush.bf16.msra.mxu0 0
        %2000 = vmatpush.bf16.msra.mxu0 0
        %2001 = vmatpush.bf16.msra.mxu0 0
        %2002 = vmatpush.bf16.msra.mxu0 0
        %2003 = vmatpush.bf16.msra.mxu0 0
        %2004 = vmatpush.bf16.msra.mxu0 0
        %2005 = vmatpush.bf16.msra.mxu0 %v1996
        %2006 = vmatmul.bf16.gmra.mxu0 %v1987
        %v2007 = vpop.f32.mrf.mxu0
        %v2008 = vadd.f32 0.0, %v2007
        %v2009 = vpop.f32.mrf.mxu0
        %v2010 = vadd.f32 0.0, %v2009
        %2011 = vmatmul.bf16.gmra.mxu0 %v1989
        %v2012 = vpop.f32.mrf.mxu0
        %v2013 = vadd.f32 0.0, %v2012
        %v2014 = vpop.f32.mrf.mxu0
        %v2015 = vadd.f32 0.0, %v2014
        %2016 = vmatmul.bf16.gmra.mxu0 %v1991
        %v2017 = vpop.f32.mrf.mxu0
        %v2018 = vadd.f32 0.0, %v2017
        %v2019 = vpop.f32.mrf.mxu0
        %v2020 = vadd.f32 0.0, %v2019
        %2021 = vmatmul.bf16.gmra.mxu0 %v1993
        %v2022 = vpop.f32.mrf.mxu0
        %v2023 = vadd.f32 0.0, %v2022
        %v2024 = vpop.f32.mrf.mxu0
        %v2025 = vadd.f32 0.0, %v2024
        %2026 = vdwg.mxu0
        %v2027 = vadd.f32 %v1977, %v2008
        %v2028 = vadd.f32 %v1978, %v2010
        %v2029 = vadd.f32 %v1979, %v2013
        %v2030 = vadd.f32 %v1980, %v2015
        %v2031 = vadd.f32 %v1981, %v2018
        %v2032 = vadd.f32 %v1982, %v2020
        %v2033 = vadd.f32 %v1983, %v2023
        %v2034 = vadd.f32 %v1984, %v2025
        %v2035 = vld [vmem:[%s7] sm:$0x1]
        %v2037 = vperm.slane %v2035, 0
        %v2039 = vadd.f32 %v2027, %v2037
        %v2040 = vadd.f32 %v2028, %v2037
        %v2041 = vadd.f32 %v2029, %v2037
        %v2042 = vadd.f32 %v2030, %v2037
        %v2043 = vadd.f32 %v2031, %v2037
        %v2044 = vadd.f32 %v2032, %v2037
        %v2045 = vadd.f32 %v2033, %v2037
        %v2046 = vadd.f32 %v2034, %v2037
        %v2047 = vsub.f32 0.0, %v2039
        %v2048 = vsub.f32 0.0, %v2040
        %v2049 = vsub.f32 0.0, %v2041
        %v2050 = vsub.f32 0.0, %v2042
        %v2051 = vsub.f32 0.0, %v2043
        %v2052 = vsub.f32 0.0, %v2044
        %v2053 = vsub.f32 0.0, %v2045
        %v2054 = vsub.f32 0.0, %v2046
        %v2055 = vmul.f32 %v2047, 1.442695
        %v2056 = vpow.pop %v2055
        %v2057 = vmul.f32 %v2048, 1.442695
        %v2058 = vpow.pop %v2057
        %v2059 = vmul.f32 %v2049, 1.442695
        %v2060 = vpow.pop %v2059
        %v2061 = vmul.f32 %v2050, 1.442695
        %v2062 = vpow.pop %v2061
        %v2063 = vmul.f32 %v2051, 1.442695
        %v2064 = vpow.pop %v2063
        %v2065 = vmul.f32 %v2052, 1.442695
        %v2066 = vpow.pop %v2065
        %v2067 = vmul.f32 %v2053, 1.442695
        %v2068 = vpow.pop %v2067
        %v2069 = vmul.f32 %v2054, 1.442695
        %v2070 = vpow.pop %v2069
        %v2071 = vadd.f32 %v2056, 1.0
        %v2072 = vadd.f32 %v2058, 1.0
        %v2073 = vadd.f32 %v2060, 1.0
        %v2074 = vadd.f32 %v2062, 1.0
        %v2075 = vadd.f32 %v2064, 1.0
        %v2076 = vadd.f32 %v2066, 1.0
        %v2077 = vadd.f32 %v2068, 1.0
        %v2078 = vadd.f32 %v2070, 1.0
        %v2079 = vrcp.pop %v2071
        %v2080 = vrcp.pop %v2072
        %v2081 = vrcp.pop %v2073
        %v2082 = vrcp.pop %v2074
        %v2083 = vrcp.pop %v2075
        %v2084 = vrcp.pop %v2076
        %v2085 = vrcp.pop %v2077
        %v2086 = vrcp.pop %v2078
        %v2087 = vmul.f32 %v2039, %v2079
        %v2088 = vmul.f32 %v2040, %v2080
        %v2089 = vmul.f32 %v2041, %v2081
        %v2090 = vmul.f32 %v2042, %v2082
        %v2091 = vmul.f32 %v2043, %v2083
        %v2092 = vmul.f32 %v2044, %v2084
        %v2093 = vmul.f32 %v2045, %v2085
        %v2094 = vmul.f32 %v2046, %v2086
        %2103 = vrot.lane.b32.xlu0 %v2087, 4
        %v2104 = vpop.permute.xlu0 %2103
        %2105 = vrot.lane.b32.xlu0 %v2088, 4
        %v2106 = vpop.permute.xlu0 %2105
        %2107 = vrot.lane.b32.xlu0 %v2089, 4
        %v2108 = vpop.permute.xlu0 %2107
        %2109 = vrot.lane.b32.xlu0 %v2090, 4
        %v2110 = vpop.permute.xlu0 %2109
        %2111 = vrot.lane.b32.xlu0 %v2091, 4
        %v2112 = vpop.permute.xlu0 %2111
        %2113 = vrot.lane.b32.xlu0 %v2092, 4
        %v2114 = vpop.permute.xlu0 %2113
        %2115 = vrot.lane.b32.xlu0 %v2093, 4
        %v2116 = vpop.permute.xlu0 %2115
        %2117 = vrot.lane.b32.xlu0 %v2094, 4
        %v2118 = vpop.permute.xlu0 %2117
        %v2127 = vsel %vm1574, %v717, %v2104
        %v2128 = vsel %vm1574, %v718, %v2106
        %v2129 = vsel %vm1574, %v719, %v2108
        %v2130 = vsel %vm1574, %v720, %v2110
        %v2131 = vsel %vm1574, %v721, %v2112
        %v2132 = vsel %vm1574, %v722, %v2114
        %v2133 = vsel %vm1574, %v723, %v2116
        %v2134 = vsel %vm1574, %v724, %v2118
        %v2135 = vpack.c.bf16 %v2127, %v2127
        %v2136 = vpack.c.bf16 %v2128, %v2128
        %v2137 = vpack.c.bf16 %v2129, %v2129
        %v2138 = vpack.c.bf16 %v2130, %v2130
        %v2139 = vpack.c.bf16 %v2131, %v2131
        %v2140 = vpack.c.bf16 %v2132, %v2132
        %v2141 = vpack.c.bf16 %v2133, %v2133
        %v2142 = vpack.c.bf16 %v2134, %v2134
        %vm2143 = vcmask 60416
        %2144 = vst.msk [vmem:[%s494] sm:$0xf] %vm2143, %v2135
        %2145 = vst.msk [vmem:[%s494 + $0x4] sm:$0xf] %vm2143, %v2136
        %2146 = vst.msk [vmem:[%s494 + $0x8] sm:$0xf] %vm2143, %v2137
        %2147 = vst.msk [vmem:[%s494 + $0xc] sm:$0xf] %vm2143, %v2138
        %2148 = vst.msk [vmem:[%s494 + $0x10] sm:$0xf] %vm2143, %v2139
        %2149 = vst.msk [vmem:[%s494 + $0x14] sm:$0xf] %vm2143, %v2140
        %2150 = vst.msk [vmem:[%s494 + $0x18] sm:$0xf] %vm2143, %v2141
        %2151 = vst.msk [vmem:[%s494 + $0x1c] sm:$0xf] %vm2143, %v2142
        %s2152 = smul.u32 8, %s19
        %p2153 = scmp.lt.s32.totalorder %s2152, 15
        %s2154 = scalar_select %p2153, %s2152, 15
        %s2155 = smul.addr %s2154, 4
        %s2156 = scalar_lea.vmem %s8, %s2155
        // Predicated region
        $region94: #{downsample_forward.1} parent=88 // pred_check
          %p2157 = pneg %p215
        $region95: #{downsample_forward.1} parent=88 // pred_check_branch
          %2159 = sbr.rel (%p2157) target = $region97
        $region96: #{downsample_forward.1} parent=88 // pred_region
          %s2160 = smul.u32 8, %s19
        $region97: #{downsample_forward.1} parent=88 // pred_fallthru
          _
      $region89: #{downsample_forward.1} parent=5 // pred_fallthru
        _
      %p2161 = scmp.le.s32.totalorder 2, %s14
      // Predicated region
      $region98: #{downsample_forward.1} parent=5 // pred_check
        %p2162 = pneg %p2161
      $region99: #{downsample_forward.1} parent=5 // pred_check_branch
        %2164 = sbr.rel (%p2162) target = $region101
      $region100: #{downsample_forward.1} parent=5 // pred_region
        %s2165 = ssub.s32 %s14, 2
        // Predicated region
        $region102: #{downsample_forward.1} parent=100 // pred_check
          %p2166 = pneg %p221
        $region103: #{downsample_forward.1} parent=100 // pred_check_branch
          %2168 = sbr.rel (%p2166) target = $region105
        $region104: #{downsample_forward.1} parent=100 // pred_region
          %s2169 = smul.u32 8, %s20
          %p2170 = scmp.lt.s32.totalorder %s2169, 15
          %s2171 = scalar_select %p2170, %s2169, 15
          %s2172 = smul.addr %s2171, 4
          %s2173 = scalar_lea.vmem %s8, %s2172
        $region105: #{downsample_forward.1} parent=100 // pred_fallthru
          _
      $region101: #{downsample_forward.1} parent=5 // pred_fallthru
        _
    $region6: #{downsample_forward.1} parent=1 // loop_footer
      %s18 = sadd.s32 1, %s14
    $region7: #{downsample_forward.1} parent=1 // loop_footer_branch
      %13 = sbr.rel target = $region3
    $region8: #{downsample_forward.1} parent=1 // loop_exit
      _

</llo_original>
